<compile_context>
chip_gen: v6e
topology: v6e:2x2x1
jax: 0.10.0
libtpu: 0.0.40
codegen_flags: <defaults>
</compile_context>

<pallas_src>
import jax
import jax.numpy as jnp
from jax import lax
from jax.experimental import pallas as pl
from jax.experimental.pallas import tpu as pltpu


def _mlb_grounding_kernel(encT_ref, encI_ref, wt_ref, bt_ref, wi_ref, bi_ref,
                          ws_ref, bs_ref, mask_ref, out_ref):
    # Per-batch program.
    #   encT_ref: (1, n_tok, Dt)    wt_ref: (Dt, M)   bt_ref: (1, M)
    #   encI_ref: (1, n_RoI, Di)    wi_ref: (Di, M)   bi_ref: (1, M)
    #   ws_ref:   (1, M)            bs_ref: (1, 1)
    #   mask_ref: (1, 1, 1, n_RoI)  out_ref: (1, n_tok, n_RoI)
    xt = jnp.tanh(
        jnp.dot(encT_ref[0], wt_ref[...], preferred_element_type=jnp.float32)
        + bt_ref[...])                                              # (n_tok, M)
    xi = jnp.tanh(
        jnp.dot(encI_ref[0], wi_ref[...], preferred_element_type=jnp.float32)
        + bi_ref[...])                                              # (n_RoI, M)

    # Fold the 1-wide score Linear into the smaller (n_tok x M) projection.
    xt_s = xt * ws_ref[...]                                         # (n_tok, M)

    # Bilinear contraction over mm_hidden; no transpose (contract dim 1 of both operands).
    logits = lax.dot_general(xt_s, xi, (((1,), (1,)), ((), ())),
                             preferred_element_type=jnp.float32)    # (n_tok, n_RoI)

    # Additive mask broadcast over tokens in-kernel (VPU), plus the score bias.
    out_ref[0] = logits + bs_ref[0, 0] + mask_ref[0, 0]             # mask_ref[0,0]: (1, n_RoI)


def mlb_grounding(encT, encI, mask, wt, bt, wi, bi, ws, bs):
    """encT: (B, n_tok, Dt) f32; encI: (B, n_RoI, Di) f32; mask: (B, 1, 1, n_RoI) additive.
    wt: (M, Dt), bt: (M,), wi: (M, Di), bi: (M,)   -- MLBFusion Linear params (PyTorch layout)
    ws: (1, M),  bs: (1,)                          -- score Linear params.
    Returns logits (B, n_tok, n_RoI)."""
    B, n_tok, Dt = encT.shape
    _, n_RoI, Di = encI.shape
    M = wt.shape[0]

    # Layout plumbing (wrapper-side, not hot path): pre-transpose weights so the kernel does no .T.
    wt_pre = jnp.asarray(wt, jnp.float32).T            # (Dt, M)
    wi_pre = jnp.asarray(wi, jnp.float32).T            # (Di, M)
    bt_2d = jnp.asarray(bt, jnp.float32).reshape(1, M)
    bi_2d = jnp.asarray(bi, jnp.float32).reshape(1, M)
    ws_2d = jnp.asarray(ws, jnp.float32).reshape(1, M)
    bs_2d = jnp.asarray(bs, jnp.float32).reshape(1, 1)
    mask = jnp.asarray(mask, jnp.float32)

    out = pl.pallas_call(
        _mlb_grounding_kernel,
        out_shape=jax.ShapeDtypeStruct((B, n_tok, n_RoI), jnp.float32),
        grid_spec=pl.GridSpec(
            grid=(B,),
            in_specs=[
                pl.BlockSpec((1, n_tok, Dt), lambda b: (b, 0, 0)),      # encT   (per batch)
                pl.BlockSpec((1, n_RoI, Di), lambda b: (b, 0, 0)),      # encI   (per batch)
                pl.BlockSpec((Dt, M), lambda b: (0, 0)),                # Wt^T   (batch-invariant)
                pl.BlockSpec((1, M), lambda b: (0, 0)),                 # bt
                pl.BlockSpec((Di, M), lambda b: (0, 0)),                # Wi^T   (batch-invariant)
                pl.BlockSpec((1, M), lambda b: (0, 0)),                 # bi
                pl.BlockSpec((1, M), lambda b: (0, 0)),                 # ws
                pl.BlockSpec((1, 1), lambda b: (0, 0)),                 # bs
                pl.BlockSpec((1, 1, 1, n_RoI), lambda b: (b, 0, 0, 0)), # mask (unbroadcast)
            ],
            out_specs=pl.BlockSpec((1, n_tok, n_RoI), lambda b: (b, 0, 0)),
        ),
        compiler_params=pltpu.CompilerParams(
            dimension_semantics=("parallel",)),
    )(encT.astype(jnp.float32), encI.astype(jnp.float32),
      wt_pre, bt_2d, wi_pre, bi_2d, ws_2d, bs_2d, mask)

    return out


if __name__ == "__main__":
    # Small config consistent with the module:
    #   cfgT.hidden_size = 32, cfgI.hidden_size = 32, mm_hidden = 1200 (module constant)
    B, n_tok, n_RoI = 2, 8, 16
    text_hidden, imag_hidden = 32, 32
    mm_hidden = 1200

    key = jax.random.PRNGKey(0)
    k_encT, k_encI, k_wt, k_bt, k_wi, k_bi, k_ws, k_bs, k_mask = jax.random.split(key, 9)

    encT = jax.random.normal(k_encT, (B, n_tok, text_hidden), dtype=jnp.float32)
    encI = jax.random.normal(k_encI, (B, n_RoI, imag_hidden), dtype=jnp.float32)

    # MLBFusion Linear params (PyTorch convention: weight (out, in), bias (out,)).
    wt = jax.random.normal(k_wt, (mm_hidden, text_hidden), dtype=jnp.float32) * 0.05
    bt = jax.random.normal(k_bt, (mm_hidden,), dtype=jnp.float32) * 0.05
    wi = jax.random.normal(k_wi, (mm_hidden, imag_hidden), dtype=jnp.float32) * 0.05
    bi = jax.random.normal(k_bi, (mm_hidden,), dtype=jnp.float32) * 0.05
    # Score Linear(mm_hidden -> 1).
    ws = jax.random.normal(k_ws, (1, mm_hidden), dtype=jnp.float32) * 0.05
    bs = jax.random.normal(k_bs, (1,), dtype=jnp.float32) * 0.05

    # BERT-style extended additive mask (B, 1, 1, n_RoI): 0 visible, -1e4 masked.
    visible = (jax.random.uniform(k_mask, (B, 1, 1, n_RoI)) > 0.2).astype(jnp.float32)
    mask = (1.0 - visible) * -10000.0

    out = mlb_grounding(encT, encI, mask, wt, bt, wi, bi, ws, bs)
    out = jax.block_until_ready(out)

    # Pure-JAX reference that follows the PyTorch forward literally (broadcast_to_match +
    # MLBFusion hadamard + score Linear + mask.squeeze(1)).
    encT_b = jnp.repeat(encT[:, :, None, :], n_RoI, axis=2).reshape(B, n_tok * n_RoI, text_hidden)
    encI_b = jnp.tile(encI, (1, n_tok, 1))
    fusion_ref = jnp.tanh(encT_b @ wt.T + bt) * jnp.tanh(encI_b @ wi.T + bi)
    score_ref = fusion_ref @ ws.T + bs                                  # (B, P, 1)
    logits_ref = score_ref.reshape(B, n_tok, n_RoI) + jnp.squeeze(mask, axis=1)

    assert out.shape == logits_ref.shape, (out.shape, logits_ref.shape)
    assert jnp.allclose(out, logits_ref, atol=1e-3, rtol=1e-3), float(
        jnp.max(jnp.abs(out - logits_ref)))

    print("KERNEL_OK")
</pallas_src>

<mosaic_0001>
module attributes {stable_mosaic.version = 11 : i64} {
  func.func @_mlb_grounding_kernel(%arg0: i32, %arg1: memref<1x8x32xf32, #tpu.memory_space<vmem>>, %arg2: memref<1x16x32xf32, #tpu.memory_space<vmem>>, %arg3: memref<32x1200xf32, #tpu.memory_space<vmem>>, %arg4: memref<1x1200xf32, #tpu.memory_space<vmem>>, %arg5: memref<32x1200xf32, #tpu.memory_space<vmem>>, %arg6: memref<1x1200xf32, #tpu.memory_space<vmem>>, %arg7: memref<1x1200xf32, #tpu.memory_space<vmem>>, %arg8: memref<1x1xf32, #tpu.memory_space<vmem>>, %arg9: memref<1x1x1x16xf32, #tpu.memory_space<vmem>>, %arg10: memref<1x8x16xf32, #tpu.memory_space<vmem>>) attributes {dimension_semantics = [#tpu.dimension_semantics<parallel>], iteration_bounds = array<i64: 2>, scalar_prefetch = 0 : i64, scratch_operands = 0 : i64, tpu.core_type = #tpu.core_type<tc>, window_params = [{transform_indices = @transform_0, window_bounds = array<i64: 1, 8, 32>}, {transform_indices = @transform_1, window_bounds = array<i64: 1, 16, 32>}, {pipeline_mode = #tpu.pipeline_mode<synchronous>, transform_indices = @transform_2, window_bounds = array<i64: 32, 1200>}, {pipeline_mode = #tpu.pipeline_mode<synchronous>, transform_indices = @transform_3, window_bounds = array<i64: 1, 1200>}, {pipeline_mode = #tpu.pipeline_mode<synchronous>, transform_indices = @transform_4, window_bounds = array<i64: 32, 1200>}, {pipeline_mode = #tpu.pipeline_mode<synchronous>, transform_indices = @transform_5, window_bounds = array<i64: 1, 1200>}, {pipeline_mode = #tpu.pipeline_mode<synchronous>, transform_indices = @transform_6, window_bounds = array<i64: 1, 1200>}, {pipeline_mode = #tpu.pipeline_mode<synchronous>, transform_indices = @transform_7, window_bounds = array<i64: 1, 1>}, {transform_indices = @transform_8, window_bounds = array<i64: 1, 1, 1, 16>}, {transform_indices = @transform_9, window_bounds = array<i64: 1, 8, 16>}]} {
    %c0 = arith.constant 0 : index
    %c0_0 = arith.constant 0 : index
    %c0_1 = arith.constant 0 : index
    %0 = vector.load %arg1[%c0, %c0_0, %c0_1] : memref<1x8x32xf32, #tpu.memory_space<vmem>>, vector<1x8x32xf32>
    %1 = vector.shape_cast %0 : vector<1x8x32xf32> to vector<8x32xf32>
    %c0_2 = arith.constant 0 : index
    %c0_3 = arith.constant 0 : index
    %2 = vector.load %arg3[%c0_2, %c0_3] : memref<32x1200xf32, #tpu.memory_space<vmem>>, vector<32x1200xf32>
    %cst = arith.constant dense<0.000000e+00> : vector<8x1200xf32>
    %3 = tpu.matmul %1, %2, %cst {dimension_numbers = #tpu.dot_dimension_numbers<[1], [0], [0], [1], [0, 0, 1, 1], [], []>} : vector<8x32xf32>, vector<32x1200xf32>, vector<8x1200xf32> -> vector<8x1200xf32>
    %c0_4 = arith.constant 0 : index
    %c0_5 = arith.constant 0 : index
    %4 = vector.load %arg4[%c0_4, %c0_5] : memref<1x1200xf32, #tpu.memory_space<vmem>>, vector<1x1200xf32>
    %5 = vector.broadcast %4 : vector<1x1200xf32> to vector<8x1200xf32>
    %6 = arith.addf %3, %5 : vector<8x1200xf32>
    %7 = math.tanh %6 : vector<8x1200xf32>
    %c0_6 = arith.constant 0 : index
    %c0_7 = arith.constant 0 : index
    %c0_8 = arith.constant 0 : index
    %8 = vector.load %arg2[%c0_6, %c0_7, %c0_8] : memref<1x16x32xf32, #tpu.memory_space<vmem>>, vector<1x16x32xf32>
    %9 = vector.shape_cast %8 : vector<1x16x32xf32> to vector<16x32xf32>
    %c0_9 = arith.constant 0 : index
    %c0_10 = arith.constant 0 : index
    %10 = vector.load %arg5[%c0_9, %c0_10] : memref<32x1200xf32, #tpu.memory_space<vmem>>, vector<32x1200xf32>
    %cst_11 = arith.constant dense<0.000000e+00> : vector<16x1200xf32>
    %11 = tpu.matmul %9, %10, %cst_11 {dimension_numbers = #tpu.dot_dimension_numbers<[1], [0], [0], [1], [0, 0, 1, 1], [], []>} : vector<16x32xf32>, vector<32x1200xf32>, vector<16x1200xf32> -> vector<16x1200xf32>
    %c0_12 = arith.constant 0 : index
    %c0_13 = arith.constant 0 : index
    %12 = vector.load %arg6[%c0_12, %c0_13] : memref<1x1200xf32, #tpu.memory_space<vmem>>, vector<1x1200xf32>
    %13 = vector.broadcast %12 : vector<1x1200xf32> to vector<16x1200xf32>
    %14 = arith.addf %11, %13 : vector<16x1200xf32>
    %15 = math.tanh %14 : vector<16x1200xf32>
    %c0_14 = arith.constant 0 : index
    %c0_15 = arith.constant 0 : index
    %16 = vector.load %arg7[%c0_14, %c0_15] : memref<1x1200xf32, #tpu.memory_space<vmem>>, vector<1x1200xf32>
    %17 = vector.broadcast %16 : vector<1x1200xf32> to vector<8x1200xf32>
    %18 = arith.mulf %7, %17 : vector<8x1200xf32>
    %cst_16 = arith.constant dense<0.000000e+00> : vector<8x16xf32>
    %19 = tpu.matmul %18, %15, %cst_16 {dimension_numbers = #tpu.dot_dimension_numbers<[1], [1], [0], [0], [0, 0, 1, 0], [], []>} : vector<8x1200xf32>, vector<16x1200xf32>, vector<8x16xf32> -> vector<8x16xf32>
    %c0_17 = arith.constant 0 : index
    %c0_18 = arith.constant 0 : index
    %20 = vector.load %arg8[%c0_17, %c0_18] : memref<1x1xf32, #tpu.memory_space<vmem>>, vector<1x1xf32>
    %21 = vector.extract %20[0, 0] : f32 from vector<1x1xf32>
    %22 = vector.broadcast %21 : f32 to vector<8x16xf32>
    %23 = arith.addf %19, %22 : vector<8x16xf32>
    %c0_19 = arith.constant 0 : index
    %c0_20 = arith.constant 0 : index
    %c0_21 = arith.constant 0 : index
    %c0_22 = arith.constant 0 : index
    %24 = vector.load %arg9[%c0_19, %c0_20, %c0_21, %c0_22] : memref<1x1x1x16xf32, #tpu.memory_space<vmem>>, vector<1x1x1x16xf32>
    %25 = vector.shape_cast %24 : vector<1x1x1x16xf32> to vector<1x16xf32>
    %26 = vector.broadcast %25 : vector<1x16xf32> to vector<8x16xf32>
    %27 = arith.addf %23, %26 : vector<8x16xf32>
    %c0_23 = arith.constant 0 : index
    %c0_24 = arith.constant 0 : index
    %c0_25 = arith.constant 0 : index
    %28 = vector.load %arg10[%c0_23, %c0_24, %c0_25] : memref<1x8x16xf32, #tpu.memory_space<vmem>>, vector<1x8x16xf32>
    %29 = vector.shape_cast %28 : vector<1x8x16xf32> to vector<8x16xf32>
    %30 = vector.shape_cast %27 : vector<8x16xf32> to vector<1x8x16xf32>
    tpu.vector_store %arg10[%c0_23, %c0_24, %c0_25], %30 {strides = array<i32>} : memref<1x8x16xf32, #tpu.memory_space<vmem>>, vector<1x8x16xf32>,
    return
  }
  func.func @transform_0(%arg0: i32) -> (i32, i32, i32) {
    %c0_i32 = arith.constant 0 : i32
    %c0_i32_0 = arith.constant 0 : i32
    %c0_i32_1 = arith.constant 0 : i32
    return %arg0, %c0_i32, %c0_i32_0 : i32, i32, i32
  }
  func.func @transform_1(%arg0: i32) -> (i32, i32, i32) {
    %c0_i32 = arith.constant 0 : i32
    %c0_i32_0 = arith.constant 0 : i32
    %c0_i32_1 = arith.constant 0 : i32
    return %arg0, %c0_i32, %c0_i32_0 : i32, i32, i32
  }
  func.func @transform_2(%arg0: i32) -> (i32, i32) {
    %c0_i32 = arith.constant 0 : i32
    %c0_i32_0 = arith.constant 0 : i32
    %c0_i32_1 = arith.constant 0 : i32
    return %c0_i32, %c0_i32_0 : i32, i32
  }
  func.func @transform_3(%arg0: i32) -> (i32, i32) {
    %c0_i32 = arith.constant 0 : i32
    %c0_i32_0 = arith.constant 0 : i32
    %c0_i32_1 = arith.constant 0 : i32
    return %c0_i32, %c0_i32_0 : i32, i32
  }
  func.func @transform_4(%arg0: i32) -> (i32, i32) {
    %c0_i32 = arith.constant 0 : i32
    %c0_i32_0 = arith.constant 0 : i32
    %c0_i32_1 = arith.constant 0 : i32
    return %c0_i32, %c0_i32_0 : i32, i32
  }
  func.func @transform_5(%arg0: i32) -> (i32, i32) {
    %c0_i32 = arith.constant 0 : i32
    %c0_i32_0 = arith.constant 0 : i32
    %c0_i32_1 = arith.constant 0 : i32
    return %c0_i32, %c0_i32_0 : i32, i32
  }
  func.func @transform_6(%arg0: i32) -> (i32, i32) {
    %c0_i32 = arith.constant 0 : i32
    %c0_i32_0 = arith.constant 0 : i32
    %c0_i32_1 = arith.constant 0 : i32
    return %c0_i32, %c0_i32_0 : i32, i32
  }
  func.func @transform_7(%arg0: i32) -> (i32, i32) {
    %c0_i32 = arith.constant 0 : i32
    %c0_i32_0 = arith.constant 0 : i32
    %c0_i32_1 = arith.constant 0 : i32
    return %c0_i32, %c0_i32_0 : i32, i32
  }
  func.func @transform_8(%arg0: i32) -> (i32, i32, i32, i32) {
    %c0_i32 = arith.constant 0 : i32
    %c0_i32_0 = arith.constant 0 : i32
    %c0_i32_1 = arith.constant 0 : i32
    %c0_i32_2 = arith.constant 0 : i32
    return %arg0, %c0_i32, %c0_i32_0, %c0_i32_1 : i32, i32, i32, i32
  }
  func.func @transform_9(%arg0: i32) -> (i32, i32, i32) {
    %c0_i32 = arith.constant 0 : i32
    %c0_i32_0 = arith.constant 0 : i32
    %c0_i32_1 = arith.constant 0 : i32
    return %arg0, %c0_i32, %c0_i32_0 : i32, i32, i32
  }
}

</mosaic_0001>

<llo_original>
// kernel: tpu_custom_call.1
$region0: #{tpu_custom_call.1}
  #allocation0 [shape = 'u32[]', space=smem, size = 0x4, offset = 0x4, fixed_abs, tag = 'smem constant byte address 0x4 - core index']
  #allocation1 [shape = 'u32[144,128]{1,0:T(1,128)}', space=vmem, size = 0x12000, scoped, tag = 'internal scratch']
  #allocation2 [shape = 'f32[1,1]{1,0:T(1,128)S(1)}', space=vmem, size = 0x200, scoped, tag = 'scoped memory for tpu_custom_call.1']
  %s0 = inlined_call_operand.hbm [shape: f32[2,8,32], index: 0, kind: input, shape index: {}]
  %s1 = inlined_call_operand.hbm [shape: f32[2,16,32], index: 1, kind: input, shape index: {}]
  %s2 = inlined_call_operand.hbm [shape: f32[32,1200], index: 2, kind: input, shape index: {}]
  %s3 = inlined_call_operand.hbm [shape: f32[1,1200], index: 3, kind: input, shape index: {}]
  %s4 = inlined_call_operand.hbm [shape: f32[32,1200], index: 4, kind: input, shape index: {}]
  %s5 = inlined_call_operand.vmem [shape: f32[1,1200], index: 5, kind: input, shape index: {}]
  %s6 = inlined_call_operand.hbm [shape: f32[1,1200], index: 6, kind: input, shape index: {}]
  %s7 = inlined_call_operand.<no memory space> [shape: f32[1,1], index: 7, kind: input, shape index: {}]
  %s8 = inlined_call_operand.vmem [shape: f32[2,1,1,16], index: 8, kind: input, shape index: {}]
  %s9 = inlined_call_operand.hbm [shape: f32[2,8,16], index: 9, kind: output, shape index: {}]
  %s10 = sld [smem:[#allocation0]]
  $region93: #{tpu_custom_call.1} parent=0
    _
  %s12 = ssub.s32 1, %s10
  %s13 = scalar_select 0, %s12, %s10
  %v14 = vstv %s7
  %15 = vst [vmem:[#allocation2] sm:$0x1] %v14
  $region1: #{tpu_custom_call.1} parent=0
    #allocation3 [shape = 'u8[8192]{0}', space=vmem, size = 0x2000, scoped, tag = 'input window, operand 0']
    #allocation4 [shape = 's32[2]{0}', space=sflag, size = 0x8, scoped, tag = 'scoped memory for tpu_custom_call.1']
    #allocation5 [shape = 's32[2]{0}', space=sflag, size = 0x8, scoped, tag = 'scoped memory for tpu_custom_call.1']
    #allocation6 [shape = 'u8[16384]{0}', space=vmem, size = 0x4000, scoped, tag = 'input window, operand 1']
    #allocation7 [shape = 's32[2]{0}', space=sflag, size = 0x8, scoped, tag = 'scoped memory for tpu_custom_call.1']
    #allocation8 [shape = 'u8[163840]{0}', space=vmem, size = 0x28000, scoped, tag = 'input window, operand 2, single buffered']
    #allocation9 [shape = 'u8[5120]{0}', space=vmem, size = 0x1400, scoped, tag = 'input window, operand 3, single buffered']
    #allocation10 [shape = 's32[1]{0}', space=sflag, size = 0x4, scoped, tag = 'scoped memory for tpu_custom_call.1']
    #allocation11 [shape = 'u8[163840]{0}', space=vmem, size = 0x28000, scoped, tag = 'input window, operand 4, single buffered']
    #allocation12 [shape = 'u8[5120]{0}', space=vmem, size = 0x1400, scoped, tag = 'input window, operand 6, single buffered']
    #allocation13 [shape = 's32[1]{0}', space=sflag, size = 0x4, scoped, tag = 'scoped memory for tpu_custom_call.1']
    #allocation14 [shape = 'u8[8192]{0}', space=vmem, size = 0x2000, scoped, tag = 'output window, operand 0']
    %16 = vsyncpa [#allocation4], 0
    %s17 = scalar_lea.sflag [#allocation4], 1
    %18 = vsyncpa %s17, 0
    %19 = vsyncpa [#allocation7], 0
    %s20 = scalar_lea.sflag [#allocation7], 1
    %21 = vsyncpa %s20, 0
    %22 = vsyncpa [#allocation10], 0
    %23 = vsyncpa [#allocation13], 0
    %24 = vsyncpa [#allocation5], 0
    %s25 = scalar_lea.sflag [#allocation5], 1
    %26 = vsyncpa %s25, 0
    loop: start=0, step=1, limit=4
    $region2: #{tpu_custom_call.1} parent=1 // loop_pre_header
      _
    $region3: #{tpu_custom_call.1} parent=1 // loop_header
      %s28 = sphi 0, %s32
      %p29 = scmp.ge.s32.totalorder %s28, 4
      %s38 = sphi 0, %s40
      %s41 = sphi 0, %s38
      %s42 = sphi 0, %s41
      %s58 = sphi 0, %s42
      %s64 = sphi 0, %s66
      %s67 = sphi 0, %s64
      %s68 = sphi 0, %s67
      %s84 = sphi 0, %s68
      %s88 = sphi 0, %s88
      %s90 = sphi 0, %s88
      %s91 = sphi 0, %s90
      %s105 = sphi 0, %s91
      %s109 = sphi 0, %s109
      %s111 = sphi 0, %s109
      %s112 = sphi 0, %s111
      %s126 = sphi 0, %s112
      %s130 = sphi 0, %s130
      %s132 = sphi 0, %s130
      %s133 = sphi 0, %s132
      %s147 = sphi 0, %s133
      %s151 = sphi 0, %s151
      %s153 = sphi 0, %s151
      %s154 = sphi 0, %s153
      %s168 = sphi 0, %s154
      %s172 = sphi 0, %s172
      %s174 = sphi 0, %s172
      %s175 = sphi 0, %s174
      %s189 = sphi 0, %s175
      %s193 = sphi 0, %s193
      %s195 = sphi 0, %s193
      %s196 = sphi 0, %s195
      %s210 = sphi 0, %s196
      %s216 = sphi 0, %s218
      %s219 = sphi 0, %s216
      %s220 = sphi 0, %s219
      %s236 = sphi 0, %s220
      %s242 = sphi 0, %s244
      %s245 = sphi 0, %s242
      %s246 = sphi 0, %s245
      %s262 = sphi 0, %s246
    $region4: #{tpu_custom_call.1} parent=1 // loop_header_branch
      %31 = sbr.rel (%p29) target = $region8
    $region5: #{tpu_custom_call.1} parent=1 // loop_body
      %s33 = ssub.s32 %s28, 1
      %s34 = ssub.s32 %s28, 2
      %s35 = sadd.s32 %s28, 1
      %s36 = ssub.s32 %s28, %s35
      %p37 = scmp.eq.s32.totalorder %s36, 0
      %s39 = sadd.s32 %s38, 1
      %s40 = scalar_select %p37, %s38, %s39
      %p43 = pneg %p37
      %p44 = scmp.eq.s32.totalorder %s28, 1
      %p45 = por %p43, %p44
      %p46 = scmp.ne.s32.totalorder %s38, %s41
      %p47 = scmp.eq.s32.totalorder %s28, 0
      %p48 = por %p46, %p47
      %p49 = scmp.ne.s32.totalorder %s38, %s41
      %p50 = scmp.eq.s32.totalorder %s33, 1
      %p51 = por %p49, %p50
      %p52 = scmp.ne.s32.totalorder %s41, %s42
      %p53 = scmp.eq.s32.totalorder %s33, 0
      %p54 = por %p52, %p53
      %p55 = scmp.ne.s32.totalorder %s41, %s42
      %p56 = scmp.eq.s32.totalorder %s34, 1
      %p57 = por %p55, %p56
      %p59 = scmp.ne.s32.totalorder %s42, %s58
      %p60 = scmp.eq.s32.totalorder %s34, 0
      %p61 = por %p59, %p60
      %s62 = ssub.s32 %s28, %s35
      %p63 = scmp.eq.s32.totalorder %s62, 0
      %s65 = sadd.s32 %s64, 1
      %s66 = scalar_select %p63, %s64, %s65
      %p69 = pneg %p63
      %p70 = scmp.eq.s32.totalorder %s28, 1
      %p71 = por %p69, %p70
      %p72 = scmp.ne.s32.totalorder %s64, %s67
      %p73 = scmp.eq.s32.totalorder %s28, 0
      %p74 = por %p72, %p73
      %p75 = scmp.ne.s32.totalorder %s64, %s67
      %p76 = scmp.eq.s32.totalorder %s33, 1
      %p77 = por %p75, %p76
      %p78 = scmp.ne.s32.totalorder %s67, %s68
      %p79 = scmp.eq.s32.totalorder %s33, 0
      %p80 = por %p78, %p79
      %p81 = scmp.ne.s32.totalorder %s67, %s68
      %p82 = scmp.eq.s32.totalorder %s34, 1
      %p83 = por %p81, %p82
      %p85 = scmp.ne.s32.totalorder %s68, %s84
      %p86 = scmp.eq.s32.totalorder %s34, 0
      %p87 = por %p85, %p86
      %s89 = sadd.s32 %s88, 1
      %p92 = scmp.eq.s32.totalorder %s28, 1
      %p93 = scmp.ne.s32.totalorder %s88, %s90
      %p94 = scmp.eq.s32.totalorder %s28, 0
      %p95 = por %p93, %p94
      %p96 = scmp.ne.s32.totalorder %s88, %s90
      %p97 = scmp.eq.s32.totalorder %s33, 1
      %p98 = por %p96, %p97
      %p99 = scmp.ne.s32.totalorder %s90, %s91
      %p100 = scmp.eq.s32.totalorder %s33, 0
      %p101 = por %p99, %p100
      %p102 = scmp.ne.s32.totalorder %s90, %s91
      %p103 = scmp.eq.s32.totalorder %s34, 1
      %p104 = por %p102, %p103
      %p106 = scmp.ne.s32.totalorder %s91, %s105
      %p107 = scmp.eq.s32.totalorder %s34, 0
      %p108 = por %p106, %p107
      %s110 = sadd.s32 %s109, 1
      %p113 = scmp.eq.s32.totalorder %s28, 1
      %p114 = scmp.ne.s32.totalorder %s109, %s111
      %p115 = scmp.eq.s32.totalorder %s28, 0
      %p116 = por %p114, %p115
      %p117 = scmp.ne.s32.totalorder %s109, %s111
      %p118 = scmp.eq.s32.totalorder %s33, 1
      %p119 = por %p117, %p118
      %p120 = scmp.ne.s32.totalorder %s111, %s112
      %p121 = scmp.eq.s32.totalorder %s33, 0
      %p122 = por %p120, %p121
      %p123 = scmp.ne.s32.totalorder %s111, %s112
      %p124 = scmp.eq.s32.totalorder %s34, 1
      %p125 = por %p123, %p124
      %p127 = scmp.ne.s32.totalorder %s112, %s126
      %p128 = scmp.eq.s32.totalorder %s34, 0
      %p129 = por %p127, %p128
      %s131 = sadd.s32 %s130, 1
      %p134 = scmp.eq.s32.totalorder %s28, 1
      %p135 = scmp.ne.s32.totalorder %s130, %s132
      %p136 = scmp.eq.s32.totalorder %s28, 0
      %p137 = por %p135, %p136
      %p138 = scmp.ne.s32.totalorder %s130, %s132
      %p139 = scmp.eq.s32.totalorder %s33, 1
      %p140 = por %p138, %p139
      %p141 = scmp.ne.s32.totalorder %s132, %s133
      %p142 = scmp.eq.s32.totalorder %s33, 0
      %p143 = por %p141, %p142
      %p144 = scmp.ne.s32.totalorder %s132, %s133
      %p145 = scmp.eq.s32.totalorder %s34, 1
      %p146 = por %p144, %p145
      %p148 = scmp.ne.s32.totalorder %s133, %s147
      %p149 = scmp.eq.s32.totalorder %s34, 0
      %p150 = por %p148, %p149
      %s152 = sadd.s32 %s151, 1
      %p155 = scmp.eq.s32.totalorder %s28, 1
      %p156 = scmp.ne.s32.totalorder %s151, %s153
      %p157 = scmp.eq.s32.totalorder %s28, 0
      %p158 = por %p156, %p157
      %p159 = scmp.ne.s32.totalorder %s151, %s153
      %p160 = scmp.eq.s32.totalorder %s33, 1
      %p161 = por %p159, %p160
      %p162 = scmp.ne.s32.totalorder %s153, %s154
      %p163 = scmp.eq.s32.totalorder %s33, 0
      %p164 = por %p162, %p163
      %p165 = scmp.ne.s32.totalorder %s153, %s154
      %p166 = scmp.eq.s32.totalorder %s34, 1
      %p167 = por %p165, %p166
      %p169 = scmp.ne.s32.totalorder %s154, %s168
      %p170 = scmp.eq.s32.totalorder %s34, 0
      %p171 = por %p169, %p170
      %s173 = sadd.s32 %s172, 1
      %p176 = scmp.eq.s32.totalorder %s28, 1
      %p177 = scmp.ne.s32.totalorder %s172, %s174
      %p178 = scmp.eq.s32.totalorder %s28, 0
      %p179 = por %p177, %p178
      %p180 = scmp.ne.s32.totalorder %s172, %s174
      %p181 = scmp.eq.s32.totalorder %s33, 1
      %p182 = por %p180, %p181
      %p183 = scmp.ne.s32.totalorder %s174, %s175
      %p184 = scmp.eq.s32.totalorder %s33, 0
      %p185 = por %p183, %p184
      %p186 = scmp.ne.s32.totalorder %s174, %s175
      %p187 = scmp.eq.s32.totalorder %s34, 1
      %p188 = por %p186, %p187
      %p190 = scmp.ne.s32.totalorder %s175, %s189
      %p191 = scmp.eq.s32.totalorder %s34, 0
      %p192 = por %p190, %p191
      %s194 = sadd.s32 %s193, 1
      %p197 = scmp.eq.s32.totalorder %s28, 1
      %p198 = scmp.ne.s32.totalorder %s193, %s195
      %p199 = scmp.eq.s32.totalorder %s28, 0
      %p200 = por %p198, %p199
      %p201 = scmp.ne.s32.totalorder %s193, %s195
      %p202 = scmp.eq.s32.totalorder %s33, 1
      %p203 = por %p201, %p202
      %p204 = scmp.ne.s32.totalorder %s195, %s196
      %p205 = scmp.eq.s32.totalorder %s33, 0
      %p206 = por %p204, %p205
      %p207 = scmp.ne.s32.totalorder %s195, %s196
      %p208 = scmp.eq.s32.totalorder %s34, 1
      %p209 = por %p207, %p208
      %p211 = scmp.ne.s32.totalorder %s196, %s210
      %p212 = scmp.eq.s32.totalorder %s34, 0
      %p213 = por %p211, %p212
      %s214 = ssub.s32 %s28, %s35
      %p215 = scmp.eq.s32.totalorder %s214, 0
      %s217 = sadd.s32 %s216, 1
      %s218 = scalar_select %p215, %s216, %s217
      %p221 = pneg %p215
      %p222 = scmp.eq.s32.totalorder %s28, 1
      %p223 = por %p221, %p222
      %p224 = scmp.ne.s32.totalorder %s216, %s219
      %p225 = scmp.eq.s32.totalorder %s28, 0
      %p226 = por %p224, %p225
      %p227 = scmp.ne.s32.totalorder %s216, %s219
      %p228 = scmp.eq.s32.totalorder %s33, 1
      %p229 = por %p227, %p228
      %p230 = scmp.ne.s32.totalorder %s219, %s220
      %p231 = scmp.eq.s32.totalorder %s33, 0
      %p232 = por %p230, %p231
      %p233 = scmp.ne.s32.totalorder %s219, %s220
      %p234 = scmp.eq.s32.totalorder %s34, 1
      %p235 = por %p233, %p234
      %p237 = scmp.ne.s32.totalorder %s220, %s236
      %p238 = scmp.eq.s32.totalorder %s34, 0
      %p239 = por %p237, %p238
      %s240 = ssub.s32 %s28, %s35
      %p241 = scmp.eq.s32.totalorder %s240, 0
      %s243 = sadd.s32 %s242, 1
      %s244 = scalar_select %p241, %s242, %s243
      %p247 = pneg %p241
      %p248 = scmp.eq.s32.totalorder %s28, 1
      %p249 = por %p247, %p248
      %p250 = scmp.ne.s32.totalorder %s242, %s245
      %p251 = scmp.eq.s32.totalorder %s28, 0
      %p252 = por %p250, %p251
      %p253 = scmp.ne.s32.totalorder %s242, %s245
      %p254 = scmp.eq.s32.totalorder %s33, 1
      %p255 = por %p253, %p254
      %p256 = scmp.ne.s32.totalorder %s245, %s246
      %p257 = scmp.eq.s32.totalorder %s33, 0
      %p258 = por %p256, %p257
      %p259 = scmp.ne.s32.totalorder %s245, %s246
      %p260 = scmp.eq.s32.totalorder %s34, 1
      %p261 = por %p259, %p260
      %p263 = scmp.ne.s32.totalorder %s246, %s262
      %p264 = scmp.eq.s32.totalorder %s34, 0
      %p265 = por %p263, %p264
      %p266 = scmp.le.s32.totalorder 1, %s28
      %p267 = scmp.lt.s32.totalorder %s28, 3
      %p268 = pnand %p266, %p267
      %p269 = pneg %p268
      // Predicated region
      $region9: #{tpu_custom_call.1} parent=5 // pred_check
        _
      $region10: #{tpu_custom_call.1} parent=5 // pred_check_branch
        %271 = sbr.rel (%p268) target = $region12
      $region11: #{tpu_custom_call.1} parent=5 // pred_region
        %s272 = ssub.s32 %s28, 1
        // Predicated region
        $region13: #{tpu_custom_call.1} parent=11 // pred_check
          %p273 = pneg %p101
        $region14: #{tpu_custom_call.1} parent=11 // pred_check_branch
          %275 = sbr.rel (%p273) target = $region16
        $region15: #{tpu_custom_call.1} parent=11 // pred_region
          %s277 = ssub.s32 5120, 5120
          %278 = vsyncadd [#allocation7], %s277
          %s279 = sshll.u32 [#allocation8], 4
          %s280 = int_to_ptr.vmem [resolvable:$true] %s279
          %285 = dma.hbm_to_vmem [thread:$0]  %s2, 5120, %s280, [#allocation7], 1280, 1280, 80
        $region16: #{tpu_custom_call.1} parent=11 // pred_fallthru
          _
        // Predicated region
        $region17: #{tpu_custom_call.1} parent=11 // pred_check
          %p286 = pneg %p122
        $region18: #{tpu_custom_call.1} parent=11 // pred_check_branch
          %288 = sbr.rel (%p286) target = $region20
        $region19: #{tpu_custom_call.1} parent=11 // pred_region
          %s290 = ssub.s32 160, 160
          %291 = vsyncadd [#allocation10], %s290
          %s293 = sshll.u32 [#allocation9], 4
          %s294 = int_to_ptr.vmem [resolvable:$true] %s293
          %296 = dma.hbm_to_vmem [thread:$0]  %s3, 160, %s294, [#allocation10]
        $region20: #{tpu_custom_call.1} parent=11 // pred_fallthru
          _
        // Predicated region
        $region21: #{tpu_custom_call.1} parent=11 // pred_check
          %p297 = pneg %p143
        $region22: #{tpu_custom_call.1} parent=11 // pred_check_branch
          %299 = sbr.rel (%p297) target = $region24
        $region23: #{tpu_custom_call.1} parent=11 // pred_region
          %s301 = ssub.s32 5120, 5120
          %302 = vsyncadd [#allocation10], %s301
          %s303 = sshll.u32 [#allocation11], 4
          %s304 = int_to_ptr.vmem [resolvable:$true] %s303
          %309 = dma.hbm_to_vmem [thread:$0]  %s4, 5120, %s304, [#allocation10], 1280, 1280, 80
        $region24: #{tpu_custom_call.1} parent=11 // pred_fallthru
          _
        // Predicated region
        $region25: #{tpu_custom_call.1} parent=11 // pred_check
          %p310 = pneg %p164
        $region26: #{tpu_custom_call.1} parent=11 // pred_check_branch
          %312 = sbr.rel (%p310) target = $region28
        $region27: #{tpu_custom_call.1} parent=11 // pred_region
          _
        $region28: #{tpu_custom_call.1} parent=11 // pred_fallthru
          _
        // Predicated region
        $region29: #{tpu_custom_call.1} parent=11 // pred_check
          %p313 = pneg %p185
        $region30: #{tpu_custom_call.1} parent=11 // pred_check_branch
          %315 = sbr.rel (%p313) target = $region32
        $region31: #{tpu_custom_call.1} parent=11 // pred_region
          %s317 = ssub.s32 160, 160
          %318 = vsyncadd [#allocation13], %s317
          %s320 = sshll.u32 [#allocation12], 4
          %s321 = int_to_ptr.vmem [resolvable:$true] %s320
          %323 = dma.hbm_to_vmem [thread:$0]  %s6, 160, %s321, [#allocation13]
        $region32: #{tpu_custom_call.1} parent=11 // pred_fallthru
          _
        // Predicated region
        $region33: #{tpu_custom_call.1} parent=11 // pred_check
          %p324 = pneg %p206
        $region34: #{tpu_custom_call.1} parent=11 // pred_check_branch
          %326 = sbr.rel (%p324) target = $region36
        $region35: #{tpu_custom_call.1} parent=11 // pred_region
          _
        $region36: #{tpu_custom_call.1} parent=11 // pred_fallthru
          _
      $region12: #{tpu_custom_call.1} parent=5 // pred_fallthru
        _
      %p327 = scmp.lt.s32.totalorder %s28, 2
      // Predicated region
      $region37: #{tpu_custom_call.1} parent=5 // pred_check
        %p328 = pneg %p327
      $region38: #{tpu_custom_call.1} parent=5 // pred_check_branch
        %330 = sbr.rel (%p328) target = $region40
      $region39: #{tpu_custom_call.1} parent=5 // pred_region
        // Predicated region
        $region41: #{tpu_custom_call.1} parent=39 // pred_check
          %p331 = pneg %p48
        $region42: #{tpu_custom_call.1} parent=39 // pred_check_branch
          %333 = sbr.rel (%p331) target = $region44
        $region43: #{tpu_custom_call.1} parent=39 // pred_region
          %s334 = sand.u32 %s38, 1
          %s335 = scalar_lea.sflag [#allocation4], %s334
          %s336 = sand.u32 %s38, 1
          %s337 = smul.addr %s336, 8
          %s338 = scalar_lea.vmem [#allocation3], %s337
          %s340 = ssub.s32 128, 128
          %341 = vsyncadd %s335, %s340
          %s342 = smul.addr %s28, 128
          %s343 = scalar_lea.hbm %s0, %s342
          %s345 = sshll.u32 %s338, 4
          %s346 = int_to_ptr.vmem [resolvable:$true] %s345
          %348 = dma.hbm_to_vmem [thread:$0]  %s343, 128, %s346, %s335
        $region44: #{tpu_custom_call.1} parent=39 // pred_fallthru
          _
        // Predicated region
        $region45: #{tpu_custom_call.1} parent=39 // pred_check
          %p349 = pneg %p74
        $region46: #{tpu_custom_call.1} parent=39 // pred_check_branch
          %351 = sbr.rel (%p349) target = $region48
        $region47: #{tpu_custom_call.1} parent=39 // pred_region
          %s352 = sand.u32 %s28, 1
          %s353 = scalar_lea.sflag [#allocation7], %s352
          %s354 = sand.u32 %s64, 1
          %s355 = smul.addr %s354, 16
          %s356 = scalar_lea.vmem [#allocation6], %s355
          %s358 = ssub.s32 256, 256
          %359 = vsyncadd %s353, %s358
          %s360 = smul.addr %s28, 2
          %s361 = smul.addr %s360, 128
          %s362 = scalar_lea.hbm %s1, %s361
          %s363 = sshll.u32 %s356, 4
          %s364 = int_to_ptr.vmem [resolvable:$true] %s363
          %369 = dma.hbm_to_vmem [thread:$0]  %s362, 256, %s364, %s353, 128, 128, 8
        $region48: #{tpu_custom_call.1} parent=39 // pred_fallthru
          _
        // Predicated region
        $region49: #{tpu_custom_call.1} parent=39 // pred_check
          %p370 = pneg %p226
        $region50: #{tpu_custom_call.1} parent=39 // pred_check_branch
          %372 = sbr.rel (%p370) target = $region52
        $region51: #{tpu_custom_call.1} parent=39 // pred_region
          %p373 = scmp.lt.s32.totalorder %s28, 1
          %s374 = scalar_select %p373, %s28, 1
          %s375 = scalar_lea.vmem %s8, %s374
        $region52: #{tpu_custom_call.1} parent=39 // pred_fallthru
          _
      $region40: #{tpu_custom_call.1} parent=5 // pred_fallthru
        _
      %p376 = scmp.le.s32.totalorder 1, %s28
      %p377 = scmp.lt.s32.totalorder %s28, 3
      %p378 = pnand %p376, %p377
      %p379 = pneg %p378
      // Predicated region
      $region53: #{tpu_custom_call.1} parent=5 // pred_check
        _
      $region54: #{tpu_custom_call.1} parent=5 // pred_check_branch
        %381 = sbr.rel (%p378) target = $region56
      $region55: #{tpu_custom_call.1} parent=5 // pred_region
        %s382 = ssub.s32 %s28, 1
        %s383 = sand.u32 %s41, 1
        %s384 = scalar_lea.sflag [#allocation4], %s383
        %s385 = sand.u32 %s41, 1
        %s386 = smul.addr %s385, 8
        %s387 = scalar_lea.vmem [#allocation3], %s386
        // Predicated region
        $region57: #{tpu_custom_call.1} parent=55 // pred_check
          %p388 = pneg %p54
        $region58: #{tpu_custom_call.1} parent=55 // pred_check_branch
          %390 = sbr.rel (%p388) target = $region60
        $region59: #{tpu_custom_call.1} parent=55 // pred_region
          %391 = dma.done %s384, 128
        $region60: #{tpu_custom_call.1} parent=55 // pred_fallthru
          _
        %s392 = sand.u32 %s33, 1
        %s393 = scalar_lea.sflag [#allocation7], %s392
        %s394 = sand.u32 %s67, 1
        %s395 = smul.addr %s394, 16
        %s396 = scalar_lea.vmem [#allocation6], %s395
        // Predicated region
        $region61: #{tpu_custom_call.1} parent=55 // pred_check
          %p397 = pneg %p80
        $region62: #{tpu_custom_call.1} parent=55 // pred_check_branch
          %399 = sbr.rel (%p397) target = $region64
        $region63: #{tpu_custom_call.1} parent=55 // pred_region
          %400 = dma.done %s393, 256
        $region64: #{tpu_custom_call.1} parent=55 // pred_fallthru
          _
        // Predicated region
        $region65: #{tpu_custom_call.1} parent=55 // pred_check
          %p401 = pneg %p101
        $region66: #{tpu_custom_call.1} parent=55 // pred_check_branch
          %403 = sbr.rel (%p401) target = $region68
        $region67: #{tpu_custom_call.1} parent=55 // pred_region
          %404 = dma.done [#allocation7], 5120
        $region68: #{tpu_custom_call.1} parent=55 // pred_fallthru
          _
        // Predicated region
        $region69: #{tpu_custom_call.1} parent=55 // pred_check
          %p405 = pneg %p122
        $region70: #{tpu_custom_call.1} parent=55 // pred_check_branch
          %407 = sbr.rel (%p405) target = $region72
        $region71: #{tpu_custom_call.1} parent=55 // pred_region
          %408 = dma.done [#allocation10], 160
        $region72: #{tpu_custom_call.1} parent=55 // pred_fallthru
          _
        // Predicated region
        $region73: #{tpu_custom_call.1} parent=55 // pred_check
          %p409 = pneg %p143
        $region74: #{tpu_custom_call.1} parent=55 // pred_check_branch
          %411 = sbr.rel (%p409) target = $region76
        $region75: #{tpu_custom_call.1} parent=55 // pred_region
          %412 = dma.done [#allocation10], 5120
        $region76: #{tpu_custom_call.1} parent=55 // pred_fallthru
          _
        // Predicated region
        $region77: #{tpu_custom_call.1} parent=55 // pred_check
          %p413 = pneg %p185
        $region78: #{tpu_custom_call.1} parent=55 // pred_check_branch
          %415 = sbr.rel (%p413) target = $region80
        $region79: #{tpu_custom_call.1} parent=55 // pred_region
          %416 = dma.done [#allocation13], 160
        $region80: #{tpu_custom_call.1} parent=55 // pred_fallthru
          _
        %s417 = sand.u32 %s41, 1
        %s418 = scalar_lea.sflag [#allocation4], %s417
        %s419 = sand.u32 %s41, 1
        %s420 = smul.addr %s419, 8
        %s421 = scalar_lea.vmem [#allocation3], %s420
        %p422 = pneg %p54
        %p423 = pneg %p51
        %s424 = sand.u32 %s33, 1
        %s425 = scalar_lea.sflag [#allocation7], %s424
        %s426 = sand.u32 %s67, 1
        %s427 = smul.addr %s426, 16
        %s428 = scalar_lea.vmem [#allocation6], %s427
        %p429 = pneg %p80
        %p430 = pneg %p77
        %p431 = pneg %p101
        %p432 = pneg %p98
        %p433 = pneg %p122
        %p434 = pneg %p119
        %p435 = pneg %p143
        %p436 = pneg %p140
        %p437 = pneg %p164
        %p438 = pneg %p161
        %p439 = pneg %p185
        %p440 = pneg %p182
        %p441 = pneg %p206
        %p442 = pneg %p203
        %p443 = scmp.lt.s32.totalorder %s33, 1
        %s444 = scalar_select %p443, %s33, 1
        %s445 = scalar_lea.vmem %s8, %s444
        %p446 = pneg %p232
        %p447 = pneg %p229
        %p448 = pneg %p258
        %p449 = pneg %p255
        %s450 = sand.u32 %s245, 1
        %s451 = scalar_lea.sflag [#allocation5], %s450
        %s452 = sand.u32 %s245, 1
        %s453 = smul.addr %s452, 8
        %s454 = scalar_lea.vmem [#allocation14], %s453
        %p455 = scmp.lt.s32.totalorder %s33, 1
        %s456 = scalar_select %p455, %s33, 1
        %s457 = scalar_lea.vmem %s8, %s456
        %v458 = vld [vmem:[%s387] sm:$0xff]
        %v459 = vld [vmem:[#allocation8] sm:$0xff]
        %v460 = vld [vmem:[#allocation8 + $0x8] sm:$0xff]
        %v461 = vld [vmem:[#allocation8 + $0x10] sm:$0xff]
        %v462 = vld [vmem:[#allocation8 + $0x18] sm:$0xff]
        %v463 = vld [vmem:[#allocation8 + $0x20] sm:$0xff]
        %v464 = vld [vmem:[#allocation8 + $0x28] sm:$0xff]
        %v465 = vld [vmem:[#allocation8 + $0x30] sm:$0xff]
        %v466 = vld [vmem:[#allocation8 + $0x38] sm:$0xff]
        %v467 = vld [vmem:[#allocation8 + $0x40] sm:$0xff]
        %v468 = vld [vmem:[#allocation8 + $0x48] sm:$0xff]
        %v469 = vld [vmem:[#allocation8 + $0x50] sm:$0xff]
        %v470 = vld [vmem:[#allocation8 + $0x58] sm:$0xff]
        %v471 = vld [vmem:[#allocation8 + $0x60] sm:$0xff]
        %v472 = vld [vmem:[#allocation8 + $0x68] sm:$0xff]
        %v473 = vld [vmem:[#allocation8 + $0x70] sm:$0xff]
        %v474 = vld [vmem:[#allocation8 + $0x78] sm:$0xff]
        %v475 = vld [vmem:[#allocation8 + $0x80] sm:$0xff]
        %v476 = vld [vmem:[#allocation8 + $0x88] sm:$0xff]
        %v477 = vld [vmem:[#allocation8 + $0x90] sm:$0xff]
        %v478 = vld [vmem:[#allocation8 + $0x98] sm:$0xff]
        %v479 = vld [vmem:[#allocation8 + $0xa0] sm:$0xff]
        %v480 = vld [vmem:[#allocation8 + $0xa8] sm:$0xff]
        %v481 = vld [vmem:[#allocation8 + $0xb0] sm:$0xff]
        %v482 = vld [vmem:[#allocation8 + $0xb8] sm:$0xff]
        %v483 = vld [vmem:[#allocation8 + $0xc0] sm:$0xff]
        %v484 = vld [vmem:[#allocation8 + $0xc8] sm:$0xff]
        %v485 = vld [vmem:[#allocation8 + $0xd0] sm:$0xff]
        %v486 = vld [vmem:[#allocation8 + $0xd8] sm:$0xff]
        %v487 = vld [vmem:[#allocation8 + $0xe0] sm:$0xff]
        %v488 = vld [vmem:[#allocation8 + $0xe8] sm:$0xff]
        %v489 = vld [vmem:[#allocation8 + $0xf0] sm:$0xff]
        %v490 = vld [vmem:[#allocation8 + $0xf8] sm:$0xff]
        %v491 = vld [vmem:[#allocation8 + $0x100] sm:$0xff]
        %v492 = vld [vmem:[#allocation8 + $0x108] sm:$0xff]
        %v493 = vld [vmem:[#allocation8 + $0x110] sm:$0xff]
        %v494 = vld [vmem:[#allocation8 + $0x118] sm:$0xff]
        %v495 = vld [vmem:[#allocation8 + $0x120] sm:$0xff]
        %v496 = vld [vmem:[#allocation8 + $0x128] sm:$0xff]
        %v497 = vld [vmem:[#allocation8 + $0x130] sm:$0xff]
        %v498 = vld [vmem:[#allocation8 + $0x138] sm:$0xff]
        %v499 = vld [vmem:[#allocation9] sm:$0xff]
        %v500 = vld [vmem:[#allocation9 + $0x8] sm:$0x3]
        %v503 = vlaneseq
        %v504 = vshrl.u32 %v503, 7
        %v505 = vsub.s32 0, %v504
        %v506 = vrot.slane %v499, %v505
        %v507 = vlaneseq
        %v508 = vshrl.u32 %v507, 7
        %v509 = vsub.s32 1, %v508
        %v510 = vrot.slane %v499, %v509
        %v511 = vlaneseq
        %v512 = vshrl.u32 %v511, 7
        %v513 = vsub.s32 2, %v512
        %v514 = vrot.slane %v499, %v513
        %v515 = vlaneseq
        %v516 = vshrl.u32 %v515, 7
        %v517 = vsub.s32 3, %v516
        %v518 = vrot.slane %v499, %v517
        %v519 = vlaneseq
        %v520 = vshrl.u32 %v519, 7
        %v521 = vsub.s32 4, %v520
        %v522 = vrot.slane %v499, %v521
        %v523 = vlaneseq
        %v524 = vshrl.u32 %v523, 7
        %v525 = vsub.s32 5, %v524
        %v526 = vrot.slane %v499, %v525
        %v527 = vlaneseq
        %v528 = vshrl.u32 %v527, 7
        %v529 = vsub.s32 6, %v528
        %v530 = vrot.slane %v499, %v529
        %v531 = vlaneseq
        %v532 = vshrl.u32 %v531, 7
        %v533 = vsub.s32 7, %v532
        %v534 = vrot.slane %v499, %v533
        %v535 = vlaneseq
        %v536 = vshrl.u32 %v535, 7
        %v537 = vsub.s32 0, %v536
        %v538 = vrot.slane %v500, %v537
        %v539 = vlaneseq
        %v540 = vshrl.u32 %v539, 7
        %v541 = vsub.s32 1, %v540
        %v542 = vrot.slane %v500, %v541
        %vm553 = vcmask 261120
        %v555 = vsel %vm553, %v458, 0
        %557 = vmatprep.subr.mxu0 0.0
        %558 = vmatpush1.msra.mxu0 0.0
        %559 = vmatprep.subr.mxu0 0.0
        %560 = vmatpush1.msra.mxu0 0.0
        %561 = vmatprep.subr.mxu0 0.0
        %562 = vmatpush1.msra.mxu0 0.0
        %563 = vmatprep.subr.mxu0 0.0
        %564 = vmatpush1.msra.mxu0 0.0
        %565 = vmatprep.subr.mxu0 0.0
        %566 = vmatpush1.msra.mxu0 0.0
        %567 = vmatprep.subr.mxu0 0.0
        %568 = vmatpush1.msra.mxu0 0.0
        %569 = vmatprep.subr.mxu0 0.0
        %570 = vmatpush1.msra.mxu0 0.0
        %571 = vmatprep.subr.mxu0 0.0
        %572 = vmatpush1.msra.mxu0 0.0
        %573 = vmatprep.subr.mxu0 0.0
        %574 = vmatpush1.msra.mxu0 0.0
        %575 = vmatprep.subr.mxu0 0.0
        %576 = vmatpush1.msra.mxu0 0.0
        %577 = vmatprep.subr.mxu0 0.0
        %578 = vmatpush1.msra.mxu0 0.0
        %579 = vmatprep.subr.mxu0 0.0
        %580 = vmatpush1.msra.mxu0 0.0
        %581 = vmatprep.subr.mxu0 %v490
        %582 = vmatpush1.msra.mxu0 %v489
        %583 = vmatprep.subr.mxu0 %v480
        %584 = vmatpush1.msra.mxu0 %v479
        %585 = vmatprep.subr.mxu0 %v470
        %586 = vmatpush1.msra.mxu0 %v469
        %587 = vmatprep.subr.mxu0 %v460
        %588 = vmatpush1.msra.mxu0 %v459
        %589 = vmatprep.subr.mxu0 0.0
        %590 = vmatpush2.msra.mxu0 0.0
        %591 = vmatprep.subr.mxu0 0.0
        %592 = vmatpush2.msra.mxu0 0.0
        %593 = vmatprep.subr.mxu0 0.0
        %594 = vmatpush2.msra.mxu0 0.0
        %595 = vmatprep.subr.mxu0 0.0
        %596 = vmatpush2.msra.mxu0 0.0
        %597 = vmatprep.subr.mxu0 0.0
        %598 = vmatpush2.msra.mxu0 0.0
        %599 = vmatprep.subr.mxu0 0.0
        %600 = vmatpush2.msra.mxu0 0.0
        %601 = vmatprep.subr.mxu0 0.0
        %602 = vmatpush2.msra.mxu0 0.0
        %603 = vmatprep.subr.mxu0 0.0
        %604 = vmatpush2.msra.mxu0 0.0
        %605 = vmatprep.subr.mxu0 0.0
        %606 = vmatpush2.msra.mxu0 0.0
        %607 = vmatprep.subr.mxu0 0.0
        %608 = vmatpush2.msra.mxu0 0.0
        %609 = vmatprep.subr.mxu0 0.0
        %610 = vmatpush2.msra.mxu0 0.0
        %611 = vmatprep.subr.mxu0 0.0
        %612 = vmatpush2.msra.mxu0 0.0
        %613 = vmatprep.subr.mxu0 0.0
        %614 = vmatpush2.msra.mxu0 0.0
        %615 = vmatprep.subr.mxu0 0.0
        %616 = vmatpush2.msra.mxu0 0.0
        %617 = vmatprep.subr.mxu0 0.0
        %618 = vmatpush2.msra.mxu0 0.0
        %619 = vmatprep.subr.mxu0 0.0
        %620 = vmatpush2.msra.mxu0 0.0
        %621 = vmatprep.mubr.f32.mxu0 0.0
        %622 = vmatmul.mubr.f32.gmra.mxu0 %v555
        %v623 = vpop.f32.mrf.mxu0
        %v624 = vadd.f32 %v506, %v623
        %v625 = vpop.f32.mrf.mxu0
        %v626 = vadd.f32 %v510, %v625
        %627 = vdwg.mxu0
        %628 = vmatprep.subr.mxu0 0.0
        %629 = vmatpush1.msra.mxu0 0.0
        %630 = vmatprep.subr.mxu0 0.0
        %631 = vmatpush1.msra.mxu0 0.0
        %632 = vmatprep.subr.mxu0 0.0
        %633 = vmatpush1.msra.mxu0 0.0
        %634 = vmatprep.subr.mxu0 0.0
        %635 = vmatpush1.msra.mxu0 0.0
        %636 = vmatprep.subr.mxu0 0.0
        %637 = vmatpush1.msra.mxu0 0.0
        %638 = vmatprep.subr.mxu0 0.0
        %639 = vmatpush1.msra.mxu0 0.0
        %640 = vmatprep.subr.mxu0 0.0
        %641 = vmatpush1.msra.mxu0 0.0
        %642 = vmatprep.subr.mxu0 0.0
        %643 = vmatpush1.msra.mxu0 0.0
        %644 = vmatprep.subr.mxu0 0.0
        %645 = vmatpush1.msra.mxu0 0.0
        %646 = vmatprep.subr.mxu0 0.0
        %647 = vmatpush1.msra.mxu0 0.0
        %648 = vmatprep.subr.mxu0 0.0
        %649 = vmatpush1.msra.mxu0 0.0
        %650 = vmatprep.subr.mxu0 0.0
        %651 = vmatpush1.msra.mxu0 0.0
        %652 = vmatprep.subr.mxu0 %v492
        %653 = vmatpush1.msra.mxu0 %v491
        %654 = vmatprep.subr.mxu0 %v482
        %655 = vmatpush1.msra.mxu0 %v481
        %656 = vmatprep.subr.mxu0 %v472
        %657 = vmatpush1.msra.mxu0 %v471
        %658 = vmatprep.subr.mxu0 %v462
        %659 = vmatpush1.msra.mxu0 %v461
        %660 = vmatprep.subr.mxu0 0.0
        %661 = vmatpush2.msra.mxu0 0.0
        %662 = vmatprep.subr.mxu0 0.0
        %663 = vmatpush2.msra.mxu0 0.0
        %664 = vmatprep.subr.mxu0 0.0
        %665 = vmatpush2.msra.mxu0 0.0
        %666 = vmatprep.subr.mxu0 0.0
        %667 = vmatpush2.msra.mxu0 0.0
        %668 = vmatprep.subr.mxu0 0.0
        %669 = vmatpush2.msra.mxu0 0.0
        %670 = vmatprep.subr.mxu0 0.0
        %671 = vmatpush2.msra.mxu0 0.0
        %672 = vmatprep.subr.mxu0 0.0
        %673 = vmatpush2.msra.mxu0 0.0
        %674 = vmatprep.subr.mxu0 0.0
        %675 = vmatpush2.msra.mxu0 0.0
        %676 = vmatprep.subr.mxu0 0.0
        %677 = vmatpush2.msra.mxu0 0.0
        %678 = vmatprep.subr.mxu0 0.0
        %679 = vmatpush2.msra.mxu0 0.0
        %680 = vmatprep.subr.mxu0 0.0
        %681 = vmatpush2.msra.mxu0 0.0
        %682 = vmatprep.subr.mxu0 0.0
        %683 = vmatpush2.msra.mxu0 0.0
        %684 = vmatprep.subr.mxu0 0.0
        %685 = vmatpush2.msra.mxu0 0.0
        %686 = vmatprep.subr.mxu0 0.0
        %687 = vmatpush2.msra.mxu0 0.0
        %688 = vmatprep.subr.mxu0 0.0
        %689 = vmatpush2.msra.mxu0 0.0
        %690 = vmatprep.subr.mxu0 0.0
        %691 = vmatpush2.msra.mxu0 0.0
        %692 = vmatprep.mubr.f32.mxu0 0.0
        %693 = vmatmul.mubr.f32.gmra.mxu0 %v555
        %v694 = vpop.f32.mrf.mxu0
        %v695 = vadd.f32 %v514, %v694
        %v696 = vpop.f32.mrf.mxu0
        %v697 = vadd.f32 %v518, %v696
        %698 = vdwg.mxu0
        %699 = vmatprep.subr.mxu0 0.0
        %700 = vmatpush1.msra.mxu0 0.0
        %701 = vmatprep.subr.mxu0 0.0
        %702 = vmatpush1.msra.mxu0 0.0
        %703 = vmatprep.subr.mxu0 0.0
        %704 = vmatpush1.msra.mxu0 0.0
        %705 = vmatprep.subr.mxu0 0.0
        %706 = vmatpush1.msra.mxu0 0.0
        %707 = vmatprep.subr.mxu0 0.0
        %708 = vmatpush1.msra.mxu0 0.0
        %709 = vmatprep.subr.mxu0 0.0
        %710 = vmatpush1.msra.mxu0 0.0
        %711 = vmatprep.subr.mxu0 0.0
        %712 = vmatpush1.msra.mxu0 0.0
        %713 = vmatprep.subr.mxu0 0.0
        %714 = vmatpush1.msra.mxu0 0.0
        %715 = vmatprep.subr.mxu0 0.0
        %716 = vmatpush1.msra.mxu0 0.0
        %717 = vmatprep.subr.mxu0 0.0
        %718 = vmatpush1.msra.mxu0 0.0
        %719 = vmatprep.subr.mxu0 0.0
        %720 = vmatpush1.msra.mxu0 0.0
        %721 = vmatprep.subr.mxu0 0.0
        %722 = vmatpush1.msra.mxu0 0.0
        %723 = vmatprep.subr.mxu0 %v494
        %724 = vmatpush1.msra.mxu0 %v493
        %725 = vmatprep.subr.mxu0 %v484
        %726 = vmatpush1.msra.mxu0 %v483
        %727 = vmatprep.subr.mxu0 %v474
        %728 = vmatpush1.msra.mxu0 %v473
        %729 = vmatprep.subr.mxu0 %v464
        %730 = vmatpush1.msra.mxu0 %v463
        %731 = vmatprep.subr.mxu0 0.0
        %732 = vmatpush2.msra.mxu0 0.0
        %733 = vmatprep.subr.mxu0 0.0
        %734 = vmatpush2.msra.mxu0 0.0
        %735 = vmatprep.subr.mxu0 0.0
        %736 = vmatpush2.msra.mxu0 0.0
        %737 = vmatprep.subr.mxu0 0.0
        %738 = vmatpush2.msra.mxu0 0.0
        %739 = vmatprep.subr.mxu0 0.0
        %740 = vmatpush2.msra.mxu0 0.0
        %741 = vmatprep.subr.mxu0 0.0
        %742 = vmatpush2.msra.mxu0 0.0
        %743 = vmatprep.subr.mxu0 0.0
        %744 = vmatpush2.msra.mxu0 0.0
        %745 = vmatprep.subr.mxu0 0.0
        %746 = vmatpush2.msra.mxu0 0.0
        %747 = vmatprep.subr.mxu0 0.0
        %748 = vmatpush2.msra.mxu0 0.0
        %749 = vmatprep.subr.mxu0 0.0
        %750 = vmatpush2.msra.mxu0 0.0
        %751 = vmatprep.subr.mxu0 0.0
        %752 = vmatpush2.msra.mxu0 0.0
        %753 = vmatprep.subr.mxu0 0.0
        %754 = vmatpush2.msra.mxu0 0.0
        %755 = vmatprep.subr.mxu0 0.0
        %756 = vmatpush2.msra.mxu0 0.0
        %757 = vmatprep.subr.mxu0 0.0
        %758 = vmatpush2.msra.mxu0 0.0
        %759 = vmatprep.subr.mxu0 0.0
        %760 = vmatpush2.msra.mxu0 0.0
        %761 = vmatprep.subr.mxu0 0.0
        %762 = vmatpush2.msra.mxu0 0.0
        %763 = vmatprep.mubr.f32.mxu0 0.0
        %764 = vmatmul.mubr.f32.gmra.mxu0 %v555
        %v765 = vpop.f32.mrf.mxu0
        %v766 = vadd.f32 %v522, %v765
        %v767 = vpop.f32.mrf.mxu0
        %v768 = vadd.f32 %v526, %v767
        %769 = vdwg.mxu0
        %770 = vmatprep.subr.mxu0 0.0
        %771 = vmatpush1.msra.mxu0 0.0
        %772 = vmatprep.subr.mxu0 0.0
        %773 = vmatpush1.msra.mxu0 0.0
        %774 = vmatprep.subr.mxu0 0.0
        %775 = vmatpush1.msra.mxu0 0.0
        %776 = vmatprep.subr.mxu0 0.0
        %777 = vmatpush1.msra.mxu0 0.0
        %778 = vmatprep.subr.mxu0 0.0
        %779 = vmatpush1.msra.mxu0 0.0
        %780 = vmatprep.subr.mxu0 0.0
        %781 = vmatpush1.msra.mxu0 0.0
        %782 = vmatprep.subr.mxu0 0.0
        %783 = vmatpush1.msra.mxu0 0.0
        %784 = vmatprep.subr.mxu0 0.0
        %785 = vmatpush1.msra.mxu0 0.0
        %786 = vmatprep.subr.mxu0 0.0
        %787 = vmatpush1.msra.mxu0 0.0
        %788 = vmatprep.subr.mxu0 0.0
        %789 = vmatpush1.msra.mxu0 0.0
        %790 = vmatprep.subr.mxu0 0.0
        %791 = vmatpush1.msra.mxu0 0.0
        %792 = vmatprep.subr.mxu0 0.0
        %793 = vmatpush1.msra.mxu0 0.0
        %794 = vmatprep.subr.mxu0 %v496
        %795 = vmatpush1.msra.mxu0 %v495
        %796 = vmatprep.subr.mxu0 %v486
        %797 = vmatpush1.msra.mxu0 %v485
        %798 = vmatprep.subr.mxu0 %v476
        %799 = vmatpush1.msra.mxu0 %v475
        %800 = vmatprep.subr.mxu0 %v466
        %801 = vmatpush1.msra.mxu0 %v465
        %802 = vmatprep.subr.mxu0 0.0
        %803 = vmatpush2.msra.mxu0 0.0
        %804 = vmatprep.subr.mxu0 0.0
        %805 = vmatpush2.msra.mxu0 0.0
        %806 = vmatprep.subr.mxu0 0.0
        %807 = vmatpush2.msra.mxu0 0.0
        %808 = vmatprep.subr.mxu0 0.0
        %809 = vmatpush2.msra.mxu0 0.0
        %810 = vmatprep.subr.mxu0 0.0
        %811 = vmatpush2.msra.mxu0 0.0
        %812 = vmatprep.subr.mxu0 0.0
        %813 = vmatpush2.msra.mxu0 0.0
        %814 = vmatprep.subr.mxu0 0.0
        %815 = vmatpush2.msra.mxu0 0.0
        %816 = vmatprep.subr.mxu0 0.0
        %817 = vmatpush2.msra.mxu0 0.0
        %818 = vmatprep.subr.mxu0 0.0
        %819 = vmatpush2.msra.mxu0 0.0
        %820 = vmatprep.subr.mxu0 0.0
        %821 = vmatpush2.msra.mxu0 0.0
        %822 = vmatprep.subr.mxu0 0.0
        %823 = vmatpush2.msra.mxu0 0.0
        %824 = vmatprep.subr.mxu0 0.0
        %825 = vmatpush2.msra.mxu0 0.0
        %826 = vmatprep.subr.mxu0 0.0
        %827 = vmatpush2.msra.mxu0 0.0
        %828 = vmatprep.subr.mxu0 0.0
        %829 = vmatpush2.msra.mxu0 0.0
        %830 = vmatprep.subr.mxu0 0.0
        %831 = vmatpush2.msra.mxu0 0.0
        %832 = vmatprep.subr.mxu0 0.0
        %833 = vmatpush2.msra.mxu0 0.0
        %834 = vmatprep.mubr.f32.mxu0 0.0
        %835 = vmatmul.mubr.f32.gmra.mxu0 %v555
        %v836 = vpop.f32.mrf.mxu0
        %v837 = vadd.f32 %v530, %v836
        %v838 = vpop.f32.mrf.mxu0
        %v839 = vadd.f32 %v534, %v838
        %840 = vdwg.mxu0
        %841 = vmatprep.subr.mxu0 0.0
        %842 = vmatpush1.msra.mxu0 0.0
        %843 = vmatprep.subr.mxu0 0.0
        %844 = vmatpush1.msra.mxu0 0.0
        %845 = vmatprep.subr.mxu0 0.0
        %846 = vmatpush1.msra.mxu0 0.0
        %847 = vmatprep.subr.mxu0 0.0
        %848 = vmatpush1.msra.mxu0 0.0
        %849 = vmatprep.subr.mxu0 0.0
        %850 = vmatpush1.msra.mxu0 0.0
        %851 = vmatprep.subr.mxu0 0.0
        %852 = vmatpush1.msra.mxu0 0.0
        %853 = vmatprep.subr.mxu0 0.0
        %854 = vmatpush1.msra.mxu0 0.0
        %855 = vmatprep.subr.mxu0 0.0
        %856 = vmatpush1.msra.mxu0 0.0
        %857 = vmatprep.subr.mxu0 0.0
        %858 = vmatpush1.msra.mxu0 0.0
        %859 = vmatprep.subr.mxu0 0.0
        %860 = vmatpush1.msra.mxu0 0.0
        %861 = vmatprep.subr.mxu0 0.0
        %862 = vmatpush1.msra.mxu0 0.0
        %863 = vmatprep.subr.mxu0 0.0
        %864 = vmatpush1.msra.mxu0 0.0
        %865 = vmatprep.subr.mxu0 %v498
        %866 = vmatpush1.msra.mxu0 %v497
        %867 = vmatprep.subr.mxu0 %v488
        %868 = vmatpush1.msra.mxu0 %v487
        %869 = vmatprep.subr.mxu0 %v478
        %870 = vmatpush1.msra.mxu0 %v477
        %871 = vmatprep.subr.mxu0 %v468
        %872 = vmatpush1.msra.mxu0 %v467
        %873 = vmatprep.subr.mxu0 0.0
        %874 = vmatpush2.msra.mxu0 0.0
        %875 = vmatprep.subr.mxu0 0.0
        %876 = vmatpush2.msra.mxu0 0.0
        %877 = vmatprep.subr.mxu0 0.0
        %878 = vmatpush2.msra.mxu0 0.0
        %879 = vmatprep.subr.mxu0 0.0
        %880 = vmatpush2.msra.mxu0 0.0
        %881 = vmatprep.subr.mxu0 0.0
        %882 = vmatpush2.msra.mxu0 0.0
        %883 = vmatprep.subr.mxu0 0.0
        %884 = vmatpush2.msra.mxu0 0.0
        %885 = vmatprep.subr.mxu0 0.0
        %886 = vmatpush2.msra.mxu0 0.0
        %887 = vmatprep.subr.mxu0 0.0
        %888 = vmatpush2.msra.mxu0 0.0
        %889 = vmatprep.subr.mxu0 0.0
        %890 = vmatpush2.msra.mxu0 0.0
        %891 = vmatprep.subr.mxu0 0.0
        %892 = vmatpush2.msra.mxu0 0.0
        %893 = vmatprep.subr.mxu0 0.0
        %894 = vmatpush2.msra.mxu0 0.0
        %895 = vmatprep.subr.mxu0 0.0
        %896 = vmatpush2.msra.mxu0 0.0
        %897 = vmatprep.subr.mxu0 0.0
        %898 = vmatpush2.msra.mxu0 0.0
        %899 = vmatprep.subr.mxu0 0.0
        %900 = vmatpush2.msra.mxu0 0.0
        %901 = vmatprep.subr.mxu0 0.0
        %902 = vmatpush2.msra.mxu0 0.0
        %903 = vmatprep.subr.mxu0 0.0
        %904 = vmatpush2.msra.mxu0 0.0
        %905 = vmatprep.mubr.f32.mxu0 0.0
        %906 = vmatmul.mubr.f32.gmra.mxu0 %v555
        %v907 = vpop.f32.mrf.mxu0
        %v908 = vadd.f32 %v538, %v907
        %v909 = vpop.f32.mrf.mxu0
        %v910 = vadd.f32 %v542, %v909
        %911 = vdwg.mxu0
        %v912 = vtanh.pop %v624
        %v913 = vtanh.pop %v626
        %v914 = vtanh.pop %v695
        %v915 = vtanh.pop %v697
        %v916 = vtanh.pop %v766
        %v917 = vtanh.pop %v768
        %v918 = vtanh.pop %v837
        %v919 = vtanh.pop %v839
        %v920 = vtanh.pop %v908
        %v921 = vtanh.pop %v910
        %v922 = vld [vmem:[%s396] sm:$0xff]
        %v923 = vld [vmem:[%s396 + $0x8] sm:$0xff]
        %v924 = vld [vmem:[#allocation11] sm:$0xff]
        %v925 = vld [vmem:[#allocation11 + $0x8] sm:$0xff]
        %v926 = vld [vmem:[#allocation11 + $0x10] sm:$0xff]
        %v927 = vld [vmem:[#allocation11 + $0x18] sm:$0xff]
        %v928 = vld [vmem:[#allocation11 + $0x20] sm:$0xff]
        %v929 = vld [vmem:[#allocation11 + $0x28] sm:$0xff]
        %v930 = vld [vmem:[#allocation11 + $0x30] sm:$0xff]
        %v931 = vld [vmem:[#allocation11 + $0x38] sm:$0xff]
        %v932 = vld [vmem:[#allocation11 + $0x40] sm:$0xff]
        %v933 = vld [vmem:[#allocation11 + $0x48] sm:$0xff]
        %v934 = vld [vmem:[#allocation11 + $0x50] sm:$0xff]
        %v935 = vld [vmem:[#allocation11 + $0x58] sm:$0xff]
        %v936 = vld [vmem:[#allocation11 + $0x60] sm:$0xff]
        %v937 = vld [vmem:[#allocation11 + $0x68] sm:$0xff]
        %v938 = vld [vmem:[#allocation11 + $0x70] sm:$0xff]
        %v939 = vld [vmem:[#allocation11 + $0x78] sm:$0xff]
        %v940 = vld [vmem:[#allocation11 + $0x80] sm:$0xff]
        %v941 = vld [vmem:[#allocation11 + $0x88] sm:$0xff]
        %v942 = vld [vmem:[#allocation11 + $0x90] sm:$0xff]
        %v943 = vld [vmem:[#allocation11 + $0x98] sm:$0xff]
        %v944 = vld [vmem:[#allocation11 + $0xa0] sm:$0xff]
        %v945 = vld [vmem:[#allocation11 + $0xa8] sm:$0xff]
        %v946 = vld [vmem:[#allocation11 + $0xb0] sm:$0xff]
        %v947 = vld [vmem:[#allocation11 + $0xb8] sm:$0xff]
        %v948 = vld [vmem:[#allocation11 + $0xc0] sm:$0xff]
        %v949 = vld [vmem:[#allocation11 + $0xc8] sm:$0xff]
        %v950 = vld [vmem:[#allocation11 + $0xd0] sm:$0xff]
        %v951 = vld [vmem:[#allocation11 + $0xd8] sm:$0xff]
        %v952 = vld [vmem:[#allocation11 + $0xe0] sm:$0xff]
        %v953 = vld [vmem:[#allocation11 + $0xe8] sm:$0xff]
        %v954 = vld [vmem:[#allocation11 + $0xf0] sm:$0xff]
        %v955 = vld [vmem:[#allocation11 + $0xf8] sm:$0xff]
        %v956 = vld [vmem:[#allocation11 + $0x100] sm:$0xff]
        %v957 = vld [vmem:[#allocation11 + $0x108] sm:$0xff]
        %v958 = vld [vmem:[#allocation11 + $0x110] sm:$0xff]
        %v959 = vld [vmem:[#allocation11 + $0x118] sm:$0xff]
        %v960 = vld [vmem:[#allocation11 + $0x120] sm:$0xff]
        %v961 = vld [vmem:[#allocation11 + $0x128] sm:$0xff]
        %v962 = vld [vmem:[#allocation11 + $0x130] sm:$0xff]
        %v963 = vld [vmem:[#allocation11 + $0x138] sm:$0xff]
        %v964 = vld [vmem:[%s5] sm:$0xff]
        %v965 = vld [vmem:[%s5 + $0x8] sm:$0x3]
        %v968 = vlaneseq
        %v969 = vshrl.u32 %v968, 7
        %v970 = vsub.s32 0, %v969
        %v971 = vrot.slane %v964, %v970
        %v972 = vlaneseq
        %v973 = vshrl.u32 %v972, 7
        %v974 = vsub.s32 1, %v973
        %v975 = vrot.slane %v964, %v974
        %v976 = vlaneseq
        %v977 = vshrl.u32 %v976, 7
        %v978 = vsub.s32 2, %v977
        %v979 = vrot.slane %v964, %v978
        %v980 = vlaneseq
        %v981 = vshrl.u32 %v980, 7
        %v982 = vsub.s32 3, %v981
        %v983 = vrot.slane %v964, %v982
        %v984 = vlaneseq
        %v985 = vshrl.u32 %v984, 7
        %v986 = vsub.s32 4, %v985
        %v987 = vrot.slane %v964, %v986
        %v988 = vlaneseq
        %v989 = vshrl.u32 %v988, 7
        %v990 = vsub.s32 5, %v989
        %v991 = vrot.slane %v964, %v990
        %v992 = vlaneseq
        %v993 = vshrl.u32 %v992, 7
        %v994 = vsub.s32 6, %v993
        %v995 = vrot.slane %v964, %v994
        %v996 = vlaneseq
        %v997 = vshrl.u32 %v996, 7
        %v998 = vsub.s32 7, %v997
        %v999 = vrot.slane %v964, %v998
        %v1000 = vlaneseq
        %v1001 = vshrl.u32 %v1000, 7
        %v1002 = vsub.s32 0, %v1001
        %v1003 = vrot.slane %v965, %v1002
        %v1004 = vlaneseq
        %v1005 = vshrl.u32 %v1004, 7
        %v1006 = vsub.s32 1, %v1005
        %v1007 = vrot.slane %v965, %v1006
        %v1019 = vsel %vm553, %v922, 0
        %v1022 = vsel %vm553, %v923, 0
        %1024 = vmatprep.subr.mxu0 0.0
        %1025 = vmatpush1.msra.mxu0 0.0
        %1026 = vmatprep.subr.mxu0 0.0
        %1027 = vmatpush1.msra.mxu0 0.0
        %1028 = vmatprep.subr.mxu0 0.0
        %1029 = vmatpush1.msra.mxu0 0.0
        %1030 = vmatprep.subr.mxu0 0.0
        %1031 = vmatpush1.msra.mxu0 0.0
        %1032 = vmatprep.subr.mxu0 0.0
        %1033 = vmatpush1.msra.mxu0 0.0
        %1034 = vmatprep.subr.mxu0 0.0
        %1035 = vmatpush1.msra.mxu0 0.0
        %1036 = vmatprep.subr.mxu0 0.0
        %1037 = vmatpush1.msra.mxu0 0.0
        %1038 = vmatprep.subr.mxu0 0.0
        %1039 = vmatpush1.msra.mxu0 0.0
        %1040 = vmatprep.subr.mxu0 0.0
        %1041 = vmatpush1.msra.mxu0 0.0
        %1042 = vmatprep.subr.mxu0 0.0
        %1043 = vmatpush1.msra.mxu0 0.0
        %1044 = vmatprep.subr.mxu0 0.0
        %1045 = vmatpush1.msra.mxu0 0.0
        %1046 = vmatprep.subr.mxu0 0.0
        %1047 = vmatpush1.msra.mxu0 0.0
        %1048 = vmatprep.subr.mxu0 %v955
        %1049 = vmatpush1.msra.mxu0 %v954
        %1050 = vmatprep.subr.mxu0 %v945
        %1051 = vmatpush1.msra.mxu0 %v944
        %1052 = vmatprep.subr.mxu0 %v935
        %1053 = vmatpush1.msra.mxu0 %v934
        %1054 = vmatprep.subr.mxu0 %v925
        %1055 = vmatpush1.msra.mxu0 %v924
        %1056 = vmatprep.subr.mxu0 0.0
        %1057 = vmatpush2.msra.mxu0 0.0
        %1058 = vmatprep.subr.mxu0 0.0
        %1059 = vmatpush2.msra.mxu0 0.0
        %1060 = vmatprep.subr.mxu0 0.0
        %1061 = vmatpush2.msra.mxu0 0.0
        %1062 = vmatprep.subr.mxu0 0.0
        %1063 = vmatpush2.msra.mxu0 0.0
        %1064 = vmatprep.subr.mxu0 0.0
        %1065 = vmatpush2.msra.mxu0 0.0
        %1066 = vmatprep.subr.mxu0 0.0
        %1067 = vmatpush2.msra.mxu0 0.0
        %1068 = vmatprep.subr.mxu0 0.0
        %1069 = vmatpush2.msra.mxu0 0.0
        %1070 = vmatprep.subr.mxu0 0.0
        %1071 = vmatpush2.msra.mxu0 0.0
        %1072 = vmatprep.subr.mxu0 0.0
        %1073 = vmatpush2.msra.mxu0 0.0
        %1074 = vmatprep.subr.mxu0 0.0
        %1075 = vmatpush2.msra.mxu0 0.0
        %1076 = vmatprep.subr.mxu0 0.0
        %1077 = vmatpush2.msra.mxu0 0.0
        %1078 = vmatprep.subr.mxu0 0.0
        %1079 = vmatpush2.msra.mxu0 0.0
        %1080 = vmatprep.subr.mxu0 0.0
        %1081 = vmatpush2.msra.mxu0 0.0
        %1082 = vmatprep.subr.mxu0 0.0
        %1083 = vmatpush2.msra.mxu0 0.0
        %1084 = vmatprep.subr.mxu0 0.0
        %1085 = vmatpush2.msra.mxu0 0.0
        %1086 = vmatprep.subr.mxu0 0.0
        %1087 = vmatpush2.msra.mxu0 0.0
        %1088 = vmatprep.mubr.f32.mxu0 0.0
        %1089 = vmatmul.mubr.f32.gmra.mxu0 %v1019
        %v1090 = vpop.f32.mrf.mxu0
        %v1091 = vadd.f32 %v971, %v1090
        %v1092 = vpop.f32.mrf.mxu0
        %v1093 = vadd.f32 %v975, %v1092
        %1094 = vmatprep.mubr.f32.mxu0 0.0
        %1095 = vmatmul.mubr.f32.gmra.mxu0 %v1022
        %v1096 = vpop.f32.mrf.mxu0
        %v1097 = vadd.f32 %v971, %v1096
        %v1098 = vpop.f32.mrf.mxu0
        %v1099 = vadd.f32 %v975, %v1098
        %1100 = vdwg.mxu0
        %1101 = vmatprep.subr.mxu0 0.0
        %1102 = vmatpush1.msra.mxu0 0.0
        %1103 = vmatprep.subr.mxu0 0.0
        %1104 = vmatpush1.msra.mxu0 0.0
        %1105 = vmatprep.subr.mxu0 0.0
        %1106 = vmatpush1.msra.mxu0 0.0
        %1107 = vmatprep.subr.mxu0 0.0
        %1108 = vmatpush1.msra.mxu0 0.0
        %1109 = vmatprep.subr.mxu0 0.0
        %1110 = vmatpush1.msra.mxu0 0.0
        %1111 = vmatprep.subr.mxu0 0.0
        %1112 = vmatpush1.msra.mxu0 0.0
        %1113 = vmatprep.subr.mxu0 0.0
        %1114 = vmatpush1.msra.mxu0 0.0
        %1115 = vmatprep.subr.mxu0 0.0
        %1116 = vmatpush1.msra.mxu0 0.0
        %1117 = vmatprep.subr.mxu0 0.0
        %1118 = vmatpush1.msra.mxu0 0.0
        %1119 = vmatprep.subr.mxu0 0.0
        %1120 = vmatpush1.msra.mxu0 0.0
        %1121 = vmatprep.subr.mxu0 0.0
        %1122 = vmatpush1.msra.mxu0 0.0
        %1123 = vmatprep.subr.mxu0 0.0
        %1124 = vmatpush1.msra.mxu0 0.0
        %1125 = vmatprep.subr.mxu0 %v957
        %1126 = vmatpush1.msra.mxu0 %v956
        %1127 = vmatprep.subr.mxu0 %v947
        %1128 = vmatpush1.msra.mxu0 %v946
        %1129 = vmatprep.subr.mxu0 %v937
        %1130 = vmatpush1.msra.mxu0 %v936
        %1131 = vmatprep.subr.mxu0 %v927
        %1132 = vmatpush1.msra.mxu0 %v926
        %1133 = vmatprep.subr.mxu0 0.0
        %1134 = vmatpush2.msra.mxu0 0.0
        %1135 = vmatprep.subr.mxu0 0.0
        %1136 = vmatpush2.msra.mxu0 0.0
        %1137 = vmatprep.subr.mxu0 0.0
        %1138 = vmatpush2.msra.mxu0 0.0
        %1139 = vmatprep.subr.mxu0 0.0
        %1140 = vmatpush2.msra.mxu0 0.0
        %1141 = vmatprep.subr.mxu0 0.0
        %1142 = vmatpush2.msra.mxu0 0.0
        %1143 = vmatprep.subr.mxu0 0.0
        %1144 = vmatpush2.msra.mxu0 0.0
        %1145 = vmatprep.subr.mxu0 0.0
        %1146 = vmatpush2.msra.mxu0 0.0
        %1147 = vmatprep.subr.mxu0 0.0
        %1148 = vmatpush2.msra.mxu0 0.0
        %1149 = vmatprep.subr.mxu0 0.0
        %1150 = vmatpush2.msra.mxu0 0.0
        %1151 = vmatprep.subr.mxu0 0.0
        %1152 = vmatpush2.msra.mxu0 0.0
        %1153 = vmatprep.subr.mxu0 0.0
        %1154 = vmatpush2.msra.mxu0 0.0
        %1155 = vmatprep.subr.mxu0 0.0
        %1156 = vmatpush2.msra.mxu0 0.0
        %1157 = vmatprep.subr.mxu0 0.0
        %1158 = vmatpush2.msra.mxu0 0.0
        %1159 = vmatprep.subr.mxu0 0.0
        %1160 = vmatpush2.msra.mxu0 0.0
        %1161 = vmatprep.subr.mxu0 0.0
        %1162 = vmatpush2.msra.mxu0 0.0
        %1163 = vmatprep.subr.mxu0 0.0
        %1164 = vmatpush2.msra.mxu0 0.0
        %1165 = vmatprep.mubr.f32.mxu0 0.0
        %1166 = vmatmul.mubr.f32.gmra.mxu0 %v1019
        %v1167 = vpop.f32.mrf.mxu0
        %v1168 = vadd.f32 %v979, %v1167
        %v1169 = vpop.f32.mrf.mxu0
        %v1170 = vadd.f32 %v983, %v1169
        %1171 = vmatprep.mubr.f32.mxu0 0.0
        %1172 = vmatmul.mubr.f32.gmra.mxu0 %v1022
        %v1173 = vpop.f32.mrf.mxu0
        %v1174 = vadd.f32 %v979, %v1173
        %v1175 = vpop.f32.mrf.mxu0
        %v1176 = vadd.f32 %v983, %v1175
        %1177 = vdwg.mxu0
        %1178 = vmatprep.subr.mxu0 0.0
        %1179 = vmatpush1.msra.mxu0 0.0
        %1180 = vmatprep.subr.mxu0 0.0
        %1181 = vmatpush1.msra.mxu0 0.0
        %1182 = vmatprep.subr.mxu0 0.0
        %1183 = vmatpush1.msra.mxu0 0.0
        %1184 = vmatprep.subr.mxu0 0.0
        %1185 = vmatpush1.msra.mxu0 0.0
        %1186 = vmatprep.subr.mxu0 0.0
        %1187 = vmatpush1.msra.mxu0 0.0
        %1188 = vmatprep.subr.mxu0 0.0
        %1189 = vmatpush1.msra.mxu0 0.0
        %1190 = vmatprep.subr.mxu0 0.0
        %1191 = vmatpush1.msra.mxu0 0.0
        %1192 = vmatprep.subr.mxu0 0.0
        %1193 = vmatpush1.msra.mxu0 0.0
        %1194 = vmatprep.subr.mxu0 0.0
        %1195 = vmatpush1.msra.mxu0 0.0
        %1196 = vmatprep.subr.mxu0 0.0
        %1197 = vmatpush1.msra.mxu0 0.0
        %1198 = vmatprep.subr.mxu0 0.0
        %1199 = vmatpush1.msra.mxu0 0.0
        %1200 = vmatprep.subr.mxu0 0.0
        %1201 = vmatpush1.msra.mxu0 0.0
        %1202 = vmatprep.subr.mxu0 %v959
        %1203 = vmatpush1.msra.mxu0 %v958
        %1204 = vmatprep.subr.mxu0 %v949
        %1205 = vmatpush1.msra.mxu0 %v948
        %1206 = vmatprep.subr.mxu0 %v939
        %1207 = vmatpush1.msra.mxu0 %v938
        %1208 = vmatprep.subr.mxu0 %v929
        %1209 = vmatpush1.msra.mxu0 %v928
        %1210 = vmatprep.subr.mxu0 0.0
        %1211 = vmatpush2.msra.mxu0 0.0
        %1212 = vmatprep.subr.mxu0 0.0
        %1213 = vmatpush2.msra.mxu0 0.0
        %1214 = vmatprep.subr.mxu0 0.0
        %1215 = vmatpush2.msra.mxu0 0.0
        %1216 = vmatprep.subr.mxu0 0.0
        %1217 = vmatpush2.msra.mxu0 0.0
        %1218 = vmatprep.subr.mxu0 0.0
        %1219 = vmatpush2.msra.mxu0 0.0
        %1220 = vmatprep.subr.mxu0 0.0
        %1221 = vmatpush2.msra.mxu0 0.0
        %1222 = vmatprep.subr.mxu0 0.0
        %1223 = vmatpush2.msra.mxu0 0.0
        %1224 = vmatprep.subr.mxu0 0.0
        %1225 = vmatpush2.msra.mxu0 0.0
        %1226 = vmatprep.subr.mxu0 0.0
        %1227 = vmatpush2.msra.mxu0 0.0
        %1228 = vmatprep.subr.mxu0 0.0
        %1229 = vmatpush2.msra.mxu0 0.0
        %1230 = vmatprep.subr.mxu0 0.0
        %1231 = vmatpush2.msra.mxu0 0.0
        %1232 = vmatprep.subr.mxu0 0.0
        %1233 = vmatpush2.msra.mxu0 0.0
        %1234 = vmatprep.subr.mxu0 0.0
        %1235 = vmatpush2.msra.mxu0 0.0
        %1236 = vmatprep.subr.mxu0 0.0
        %1237 = vmatpush2.msra.mxu0 0.0
        %1238 = vmatprep.subr.mxu0 0.0
        %1239 = vmatpush2.msra.mxu0 0.0
        %1240 = vmatprep.subr.mxu0 0.0
        %1241 = vmatpush2.msra.mxu0 0.0
        %1242 = vmatprep.mubr.f32.mxu0 0.0
        %1243 = vmatmul.mubr.f32.gmra.mxu0 %v1019
        %v1244 = vpop.f32.mrf.mxu0
        %v1245 = vadd.f32 %v987, %v1244
        %v1246 = vpop.f32.mrf.mxu0
        %v1247 = vadd.f32 %v991, %v1246
        %1248 = vmatprep.mubr.f32.mxu0 0.0
        %1249 = vmatmul.mubr.f32.gmra.mxu0 %v1022
        %v1250 = vpop.f32.mrf.mxu0
        %v1251 = vadd.f32 %v987, %v1250
        %v1252 = vpop.f32.mrf.mxu0
        %v1253 = vadd.f32 %v991, %v1252
        %1254 = vdwg.mxu0
        %1255 = vmatprep.subr.mxu0 0.0
        %1256 = vmatpush1.msra.mxu0 0.0
        %1257 = vmatprep.subr.mxu0 0.0
        %1258 = vmatpush1.msra.mxu0 0.0
        %1259 = vmatprep.subr.mxu0 0.0
        %1260 = vmatpush1.msra.mxu0 0.0
        %1261 = vmatprep.subr.mxu0 0.0
        %1262 = vmatpush1.msra.mxu0 0.0
        %1263 = vmatprep.subr.mxu0 0.0
        %1264 = vmatpush1.msra.mxu0 0.0
        %1265 = vmatprep.subr.mxu0 0.0
        %1266 = vmatpush1.msra.mxu0 0.0
        %1267 = vmatprep.subr.mxu0 0.0
        %1268 = vmatpush1.msra.mxu0 0.0
        %1269 = vmatprep.subr.mxu0 0.0
        %1270 = vmatpush1.msra.mxu0 0.0
        %1271 = vmatprep.subr.mxu0 0.0
        %1272 = vmatpush1.msra.mxu0 0.0
        %1273 = vmatprep.subr.mxu0 0.0
        %1274 = vmatpush1.msra.mxu0 0.0
        %1275 = vmatprep.subr.mxu0 0.0
        %1276 = vmatpush1.msra.mxu0 0.0
        %1277 = vmatprep.subr.mxu0 0.0
        %1278 = vmatpush1.msra.mxu0 0.0
        %1279 = vmatprep.subr.mxu0 %v961
        %1280 = vmatpush1.msra.mxu0 %v960
        %1281 = vmatprep.subr.mxu0 %v951
        %1282 = vmatpush1.msra.mxu0 %v950
        %1283 = vmatprep.subr.mxu0 %v941
        %1284 = vmatpush1.msra.mxu0 %v940
        %1285 = vmatprep.subr.mxu0 %v931
        %1286 = vmatpush1.msra.mxu0 %v930
        %1287 = vmatprep.subr.mxu0 0.0
        %1288 = vmatpush2.msra.mxu0 0.0
        %1289 = vmatprep.subr.mxu0 0.0
        %1290 = vmatpush2.msra.mxu0 0.0
        %1291 = vmatprep.subr.mxu0 0.0
        %1292 = vmatpush2.msra.mxu0 0.0
        %1293 = vmatprep.subr.mxu0 0.0
        %1294 = vmatpush2.msra.mxu0 0.0
        %1295 = vmatprep.subr.mxu0 0.0
        %1296 = vmatpush2.msra.mxu0 0.0
        %1297 = vmatprep.subr.mxu0 0.0
        %1298 = vmatpush2.msra.mxu0 0.0
        %1299 = vmatprep.subr.mxu0 0.0
        %1300 = vmatpush2.msra.mxu0 0.0
        %1301 = vmatprep.subr.mxu0 0.0
        %1302 = vmatpush2.msra.mxu0 0.0
        %1303 = vmatprep.subr.mxu0 0.0
        %1304 = vmatpush2.msra.mxu0 0.0
        %1305 = vmatprep.subr.mxu0 0.0
        %1306 = vmatpush2.msra.mxu0 0.0
        %1307 = vmatprep.subr.mxu0 0.0
        %1308 = vmatpush2.msra.mxu0 0.0
        %1309 = vmatprep.subr.mxu0 0.0
        %1310 = vmatpush2.msra.mxu0 0.0
        %1311 = vmatprep.subr.mxu0 0.0
        %1312 = vmatpush2.msra.mxu0 0.0
        %1313 = vmatprep.subr.mxu0 0.0
        %1314 = vmatpush2.msra.mxu0 0.0
        %1315 = vmatprep.subr.mxu0 0.0
        %1316 = vmatpush2.msra.mxu0 0.0
        %1317 = vmatprep.subr.mxu0 0.0
        %1318 = vmatpush2.msra.mxu0 0.0
        %1319 = vmatprep.mubr.f32.mxu0 0.0
        %1320 = vmatmul.mubr.f32.gmra.mxu0 %v1019
        %v1321 = vpop.f32.mrf.mxu0
        %v1322 = vadd.f32 %v995, %v1321
        %v1323 = vpop.f32.mrf.mxu0
        %v1324 = vadd.f32 %v999, %v1323
        %1325 = vmatprep.mubr.f32.mxu0 0.0
        %1326 = vmatmul.mubr.f32.gmra.mxu0 %v1022
        %v1327 = vpop.f32.mrf.mxu0
        %v1328 = vadd.f32 %v995, %v1327
        %v1329 = vpop.f32.mrf.mxu0
        %v1330 = vadd.f32 %v999, %v1329
        %1331 = vdwg.mxu0
        %1332 = vmatprep.subr.mxu0 0.0
        %1333 = vmatpush1.msra.mxu0 0.0
        %1334 = vmatprep.subr.mxu0 0.0
        %1335 = vmatpush1.msra.mxu0 0.0
        %1336 = vmatprep.subr.mxu0 0.0
        %1337 = vmatpush1.msra.mxu0 0.0
        %1338 = vmatprep.subr.mxu0 0.0
        %1339 = vmatpush1.msra.mxu0 0.0
        %1340 = vmatprep.subr.mxu0 0.0
        %1341 = vmatpush1.msra.mxu0 0.0
        %1342 = vmatprep.subr.mxu0 0.0
        %1343 = vmatpush1.msra.mxu0 0.0
        %1344 = vmatprep.subr.mxu0 0.0
        %1345 = vmatpush1.msra.mxu0 0.0
        %1346 = vmatprep.subr.mxu0 0.0
        %1347 = vmatpush1.msra.mxu0 0.0
        %1348 = vmatprep.subr.mxu0 0.0
        %1349 = vmatpush1.msra.mxu0 0.0
        %1350 = vmatprep.subr.mxu0 0.0
        %1351 = vmatpush1.msra.mxu0 0.0
        %1352 = vmatprep.subr.mxu0 0.0
        %1353 = vmatpush1.msra.mxu0 0.0
        %1354 = vmatprep.subr.mxu0 0.0
        %1355 = vmatpush1.msra.mxu0 0.0
        %1356 = vmatprep.subr.mxu0 %v963
        %1357 = vmatpush1.msra.mxu0 %v962
        %1358 = vmatprep.subr.mxu0 %v953
        %1359 = vmatpush1.msra.mxu0 %v952
        %1360 = vmatprep.subr.mxu0 %v943
        %1361 = vmatpush1.msra.mxu0 %v942
        %1362 = vmatprep.subr.mxu0 %v933
        %1363 = vmatpush1.msra.mxu0 %v932
        %1364 = vmatprep.subr.mxu0 0.0
        %1365 = vmatpush2.msra.mxu0 0.0
        %1366 = vmatprep.subr.mxu0 0.0
        %1367 = vmatpush2.msra.mxu0 0.0
        %1368 = vmatprep.subr.mxu0 0.0
        %1369 = vmatpush2.msra.mxu0 0.0
        %1370 = vmatprep.subr.mxu0 0.0
        %1371 = vmatpush2.msra.mxu0 0.0
        %1372 = vmatprep.subr.mxu0 0.0
        %1373 = vmatpush2.msra.mxu0 0.0
        %1374 = vmatprep.subr.mxu0 0.0
        %1375 = vmatpush2.msra.mxu0 0.0
        %1376 = vmatprep.subr.mxu0 0.0
        %1377 = vmatpush2.msra.mxu0 0.0
        %1378 = vmatprep.subr.mxu0 0.0
        %1379 = vmatpush2.msra.mxu0 0.0
        %1380 = vmatprep.subr.mxu0 0.0
        %1381 = vmatpush2.msra.mxu0 0.0
        %1382 = vmatprep.subr.mxu0 0.0
        %1383 = vmatpush2.msra.mxu0 0.0
        %1384 = vmatprep.subr.mxu0 0.0
        %1385 = vmatpush2.msra.mxu0 0.0
        %1386 = vmatprep.subr.mxu0 0.0
        %1387 = vmatpush2.msra.mxu0 0.0
        %1388 = vmatprep.subr.mxu0 0.0
        %1389 = vmatpush2.msra.mxu0 0.0
        %1390 = vmatprep.subr.mxu0 0.0
        %1391 = vmatpush2.msra.mxu0 0.0
        %1392 = vmatprep.subr.mxu0 0.0
        %1393 = vmatpush2.msra.mxu0 0.0
        %1394 = vmatprep.subr.mxu0 0.0
        %1395 = vmatpush2.msra.mxu0 0.0
        %1396 = vmatprep.mubr.f32.mxu0 0.0
        %1397 = vmatmul.mubr.f32.gmra.mxu0 %v1019
        %v1398 = vpop.f32.mrf.mxu0
        %v1399 = vadd.f32 %v1003, %v1398
        %v1400 = vpop.f32.mrf.mxu0
        %v1401 = vadd.f32 %v1007, %v1400
        %1402 = vmatprep.mubr.f32.mxu0 0.0
        %1403 = vmatmul.mubr.f32.gmra.mxu0 %v1022
        %v1404 = vpop.f32.mrf.mxu0
        %v1405 = vadd.f32 %v1003, %v1404
        %v1406 = vpop.f32.mrf.mxu0
        %v1407 = vadd.f32 %v1007, %v1406
        %1408 = vdwg.mxu0
        %v1409 = vtanh.pop %v1091
        %v1410 = vtanh.pop %v1093
        %v1411 = vtanh.pop %v1168
        %v1412 = vtanh.pop %v1170
        %v1413 = vtanh.pop %v1245
        %v1414 = vtanh.pop %v1247
        %v1415 = vtanh.pop %v1322
        %v1416 = vtanh.pop %v1324
        %v1417 = vtanh.pop %v1399
        %v1418 = vtanh.pop %v1401
        %v1419 = vtanh.pop %v1097
        %v1420 = vtanh.pop %v1099
        %v1421 = vtanh.pop %v1174
        %v1422 = vtanh.pop %v1176
        %v1423 = vtanh.pop %v1251
        %v1424 = vtanh.pop %v1253
        %v1425 = vtanh.pop %v1328
        %v1426 = vtanh.pop %v1330
        %v1427 = vtanh.pop %v1405
        %v1428 = vtanh.pop %v1407
        %v1429 = vld [vmem:[#allocation12] sm:$0xff]
        %v1430 = vld [vmem:[#allocation12 + $0x8] sm:$0x3]
        %v1433 = vlaneseq
        %v1434 = vshrl.u32 %v1433, 7
        %v1435 = vsub.s32 0, %v1434
        %v1436 = vrot.slane %v1429, %v1435
        %v1437 = vlaneseq
        %v1438 = vshrl.u32 %v1437, 7
        %v1439 = vsub.s32 1, %v1438
        %v1440 = vrot.slane %v1429, %v1439
        %v1441 = vlaneseq
        %v1442 = vshrl.u32 %v1441, 7
        %v1443 = vsub.s32 2, %v1442
        %v1444 = vrot.slane %v1429, %v1443
        %v1445 = vlaneseq
        %v1446 = vshrl.u32 %v1445, 7
        %v1447 = vsub.s32 3, %v1446
        %v1448 = vrot.slane %v1429, %v1447
        %v1449 = vlaneseq
        %v1450 = vshrl.u32 %v1449, 7
        %v1451 = vsub.s32 4, %v1450
        %v1452 = vrot.slane %v1429, %v1451
        %v1453 = vlaneseq
        %v1454 = vshrl.u32 %v1453, 7
        %v1455 = vsub.s32 5, %v1454
        %v1456 = vrot.slane %v1429, %v1455
        %v1457 = vlaneseq
        %v1458 = vshrl.u32 %v1457, 7
        %v1459 = vsub.s32 6, %v1458
        %v1460 = vrot.slane %v1429, %v1459
        %v1461 = vlaneseq
        %v1462 = vshrl.u32 %v1461, 7
        %v1463 = vsub.s32 7, %v1462
        %v1464 = vrot.slane %v1429, %v1463
        %v1465 = vlaneseq
        %v1466 = vshrl.u32 %v1465, 7
        %v1467 = vsub.s32 0, %v1466
        %v1468 = vrot.slane %v1430, %v1467
        %v1469 = vlaneseq
        %v1470 = vshrl.u32 %v1469, 7
        %v1471 = vsub.s32 1, %v1470
        %v1472 = vrot.slane %v1430, %v1471
        %v1483 = vmul.f32 %v912, %v1436
        %v1484 = vmul.f32 %v913, %v1440
        %v1485 = vmul.f32 %v914, %v1444
        %v1486 = vmul.f32 %v915, %v1448
        %v1487 = vmul.f32 %v916, %v1452
        %v1488 = vmul.f32 %v917, %v1456
        %v1489 = vmul.f32 %v918, %v1460
        %v1490 = vmul.f32 %v919, %v1464
        %v1491 = vmul.f32 %v920, %v1468
        %v1492 = vmul.f32 %v921, %v1472
        %v1493 = vld [vmem:[#allocation2] sm:$0x1]
        %s1494 = vtos %v1493
        %v1495 = vstv %s1494
        %vm1496 = vcmask 392192
        %v1498 = vsel %vm1496, %v1492, 0
        %v1501 = vsel %vm1496, %v1418, 0
        %v1504 = vsel %vm1496, %v1428, 0
        %1506 = vmatprep.subr.mxu0 0.0
        %1507 = vmatpush1.xpose.msra.mxu0 0.0
        %1508 = vmatprep.subr.mxu0 0.0
        %1509 = vmatpush1.xpose.msra.mxu0 0.0
        %1510 = vmatprep.subr.mxu0 0.0
        %1511 = vmatpush1.xpose.msra.mxu0 0.0
        %1512 = vmatprep.subr.mxu0 0.0
        %1513 = vmatpush1.xpose.msra.mxu0 0.0
        %1514 = vmatprep.subr.mxu0 0.0
        %1515 = vmatpush1.xpose.msra.mxu0 0.0
        %1516 = vmatprep.subr.mxu0 0.0
        %1517 = vmatpush1.xpose.msra.mxu0 0.0
        %1518 = vmatprep.subr.mxu0 0.0
        %1519 = vmatpush1.xpose.msra.mxu0 0.0
        %1520 = vmatprep.subr.mxu0 0.0
        %1521 = vmatpush1.xpose.msra.mxu0 0.0
        %1522 = vmatprep.subr.mxu0 0.0
        %1523 = vmatpush1.xpose.msra.mxu0 0.0
        %1524 = vmatprep.subr.mxu0 0.0
        %1525 = vmatpush1.xpose.msra.mxu0 0.0
        %1526 = vmatprep.subr.mxu0 0.0
        %1527 = vmatpush1.xpose.msra.mxu0 0.0
        %1528 = vmatprep.subr.mxu0 0.0
        %1529 = vmatpush1.xpose.msra.mxu0 0.0
        %1530 = vmatprep.subr.mxu0 0.0
        %1531 = vmatpush1.xpose.msra.mxu0 0.0
        %1532 = vmatprep.subr.mxu0 0.0
        %1533 = vmatpush1.xpose.msra.mxu0 0.0
        %1534 = vmatprep.subr.mxu0 %v1420
        %1535 = vmatpush1.xpose.msra.mxu0 %v1419
        %1536 = vmatprep.subr.mxu0 %v1410
        %1537 = vmatpush1.xpose.msra.mxu0 %v1409
        %1538 = vmatprep.subr.mxu0 0.0
        %1539 = vmatpush2.xpose.msra.mxu0 0.0
        %1540 = vmatprep.subr.mxu0 0.0
        %1541 = vmatpush2.xpose.msra.mxu0 0.0
        %1542 = vmatprep.subr.mxu0 0.0
        %1543 = vmatpush2.xpose.msra.mxu0 0.0
        %1544 = vmatprep.subr.mxu0 0.0
        %1545 = vmatpush2.xpose.msra.mxu0 0.0
        %1546 = vmatprep.subr.mxu0 0.0
        %1547 = vmatpush2.xpose.msra.mxu0 0.0
        %1548 = vmatprep.subr.mxu0 0.0
        %1549 = vmatpush2.xpose.msra.mxu0 0.0
        %1550 = vmatprep.subr.mxu0 0.0
        %1551 = vmatpush2.xpose.msra.mxu0 0.0
        %1552 = vmatprep.subr.mxu0 0.0
        %1553 = vmatpush2.xpose.msra.mxu0 0.0
        %1554 = vmatprep.subr.mxu0 0.0
        %1555 = vmatpush2.xpose.msra.mxu0 0.0
        %1556 = vmatprep.subr.mxu0 0.0
        %1557 = vmatpush2.xpose.msra.mxu0 0.0
        %1558 = vmatprep.subr.mxu0 0.0
        %1559 = vmatpush2.xpose.msra.mxu0 0.0
        %1560 = vmatprep.subr.mxu0 0.0
        %1561 = vmatpush2.xpose.msra.mxu0 0.0
        %1562 = vmatprep.subr.mxu0 0.0
        %1563 = vmatpush2.xpose.msra.mxu0 0.0
        %1564 = vmatprep.subr.mxu0 0.0
        %1565 = vmatpush2.xpose.msra.mxu0 0.0
        %1566 = vmatprep.subr.mxu0 0.0
        %1567 = vmatpush2.xpose.msra.mxu0 0.0
        %1568 = vmatprep.subr.mxu0 0.0
        %1569 = vmatpush2.xpose.msra.mxu0 0.0
        %1570 = vmatprep.mubr.f32.mxu0 %v1484
        %1571 = vmatmul.mubr.f32.gmra.mxu0 %v1483
        %v1572 = vpop.f32.mrf.mxu0
        %v1573 = vadd.f32 %v1495, %v1572
        %v1574 = vpop.f32.mrf.mxu0
        %1575 = vdwg.mxu0
        %1576 = vmatprep.subr.mxu0 0.0
        %1577 = vmatpush1.xpose.msra.mxu0 0.0
        %1578 = vmatprep.subr.mxu0 0.0
        %1579 = vmatpush1.xpose.msra.mxu0 0.0
        %1580 = vmatprep.subr.mxu0 0.0
        %1581 = vmatpush1.xpose.msra.mxu0 0.0
        %1582 = vmatprep.subr.mxu0 0.0
        %1583 = vmatpush1.xpose.msra.mxu0 0.0
        %1584 = vmatprep.subr.mxu0 0.0
        %1585 = vmatpush1.xpose.msra.mxu0 0.0
        %1586 = vmatprep.subr.mxu0 0.0
        %1587 = vmatpush1.xpose.msra.mxu0 0.0
        %1588 = vmatprep.subr.mxu0 0.0
        %1589 = vmatpush1.xpose.msra.mxu0 0.0
        %1590 = vmatprep.subr.mxu0 0.0
        %1591 = vmatpush1.xpose.msra.mxu0 0.0
        %1592 = vmatprep.subr.mxu0 0.0
        %1593 = vmatpush1.xpose.msra.mxu0 0.0
        %1594 = vmatprep.subr.mxu0 0.0
        %1595 = vmatpush1.xpose.msra.mxu0 0.0
        %1596 = vmatprep.subr.mxu0 0.0
        %1597 = vmatpush1.xpose.msra.mxu0 0.0
        %1598 = vmatprep.subr.mxu0 0.0
        %1599 = vmatpush1.xpose.msra.mxu0 0.0
        %1600 = vmatprep.subr.mxu0 0.0
        %1601 = vmatpush1.xpose.msra.mxu0 0.0
        %1602 = vmatprep.subr.mxu0 0.0
        %1603 = vmatpush1.xpose.msra.mxu0 0.0
        %1604 = vmatprep.subr.mxu0 %v1422
        %1605 = vmatpush1.xpose.msra.mxu0 %v1421
        %1606 = vmatprep.subr.mxu0 %v1412
        %1607 = vmatpush1.xpose.msra.mxu0 %v1411
        %1608 = vmatprep.subr.mxu0 0.0
        %1609 = vmatpush2.xpose.msra.mxu0 0.0
        %1610 = vmatprep.subr.mxu0 0.0
        %1611 = vmatpush2.xpose.msra.mxu0 0.0
        %1612 = vmatprep.subr.mxu0 0.0
        %1613 = vmatpush2.xpose.msra.mxu0 0.0
        %1614 = vmatprep.subr.mxu0 0.0
        %1615 = vmatpush2.xpose.msra.mxu0 0.0
        %1616 = vmatprep.subr.mxu0 0.0
        %1617 = vmatpush2.xpose.msra.mxu0 0.0
        %1618 = vmatprep.subr.mxu0 0.0
        %1619 = vmatpush2.xpose.msra.mxu0 0.0
        %1620 = vmatprep.subr.mxu0 0.0
        %1621 = vmatpush2.xpose.msra.mxu0 0.0
        %1622 = vmatprep.subr.mxu0 0.0
        %1623 = vmatpush2.xpose.msra.mxu0 0.0
        %1624 = vmatprep.subr.mxu0 0.0
        %1625 = vmatpush2.xpose.msra.mxu0 0.0
        %1626 = vmatprep.subr.mxu0 0.0
        %1627 = vmatpush2.xpose.msra.mxu0 0.0
        %1628 = vmatprep.subr.mxu0 0.0
        %1629 = vmatpush2.xpose.msra.mxu0 0.0
        %1630 = vmatprep.subr.mxu0 0.0
        %1631 = vmatpush2.xpose.msra.mxu0 0.0
        %1632 = vmatprep.subr.mxu0 0.0
        %1633 = vmatpush2.xpose.msra.mxu0 0.0
        %1634 = vmatprep.subr.mxu0 0.0
        %1635 = vmatpush2.xpose.msra.mxu0 0.0
        %1636 = vmatprep.subr.mxu0 0.0
        %1637 = vmatpush2.xpose.msra.mxu0 0.0
        %1638 = vmatprep.subr.mxu0 0.0
        %1639 = vmatpush2.xpose.msra.mxu0 0.0
        %1640 = vmatprep.mubr.f32.mxu0 %v1486
        %1641 = vmatmul.mubr.f32.gmra.mxu0 %v1485
        %v1642 = vpop.f32.mrf.mxu0
        %v1643 = vadd.f32 %v1573, %v1642
        %v1644 = vpop.f32.mrf.mxu0
        %1645 = vdwg.mxu0
        %1646 = vmatprep.subr.mxu0 0.0
        %1647 = vmatpush1.xpose.msra.mxu0 0.0
        %1648 = vmatprep.subr.mxu0 0.0
        %1649 = vmatpush1.xpose.msra.mxu0 0.0
        %1650 = vmatprep.subr.mxu0 0.0
        %1651 = vmatpush1.xpose.msra.mxu0 0.0
        %1652 = vmatprep.subr.mxu0 0.0
        %1653 = vmatpush1.xpose.msra.mxu0 0.0
        %1654 = vmatprep.subr.mxu0 0.0
        %1655 = vmatpush1.xpose.msra.mxu0 0.0
        %1656 = vmatprep.subr.mxu0 0.0
        %1657 = vmatpush1.xpose.msra.mxu0 0.0
        %1658 = vmatprep.subr.mxu0 0.0
        %1659 = vmatpush1.xpose.msra.mxu0 0.0
        %1660 = vmatprep.subr.mxu0 0.0
        %1661 = vmatpush1.xpose.msra.mxu0 0.0
        %1662 = vmatprep.subr.mxu0 0.0
        %1663 = vmatpush1.xpose.msra.mxu0 0.0
        %1664 = vmatprep.subr.mxu0 0.0
        %1665 = vmatpush1.xpose.msra.mxu0 0.0
        %1666 = vmatprep.subr.mxu0 0.0
        %1667 = vmatpush1.xpose.msra.mxu0 0.0
        %1668 = vmatprep.subr.mxu0 0.0
        %1669 = vmatpush1.xpose.msra.mxu0 0.0
        %1670 = vmatprep.subr.mxu0 0.0
        %1671 = vmatpush1.xpose.msra.mxu0 0.0
        %1672 = vmatprep.subr.mxu0 0.0
        %1673 = vmatpush1.xpose.msra.mxu0 0.0
        %1674 = vmatprep.subr.mxu0 %v1424
        %1675 = vmatpush1.xpose.msra.mxu0 %v1423
        %1676 = vmatprep.subr.mxu0 %v1414
        %1677 = vmatpush1.xpose.msra.mxu0 %v1413
        %1678 = vmatprep.subr.mxu0 0.0
        %1679 = vmatpush2.xpose.msra.mxu0 0.0
        %1680 = vmatprep.subr.mxu0 0.0
        %1681 = vmatpush2.xpose.msra.mxu0 0.0
        %1682 = vmatprep.subr.mxu0 0.0
        %1683 = vmatpush2.xpose.msra.mxu0 0.0
        %1684 = vmatprep.subr.mxu0 0.0
        %1685 = vmatpush2.xpose.msra.mxu0 0.0
        %1686 = vmatprep.subr.mxu0 0.0
        %1687 = vmatpush2.xpose.msra.mxu0 0.0
        %1688 = vmatprep.subr.mxu0 0.0
        %1689 = vmatpush2.xpose.msra.mxu0 0.0
        %1690 = vmatprep.subr.mxu0 0.0
        %1691 = vmatpush2.xpose.msra.mxu0 0.0
        %1692 = vmatprep.subr.mxu0 0.0
        %1693 = vmatpush2.xpose.msra.mxu0 0.0
        %1694 = vmatprep.subr.mxu0 0.0
        %1695 = vmatpush2.xpose.msra.mxu0 0.0
        %1696 = vmatprep.subr.mxu0 0.0
        %1697 = vmatpush2.xpose.msra.mxu0 0.0
        %1698 = vmatprep.subr.mxu0 0.0
        %1699 = vmatpush2.xpose.msra.mxu0 0.0
        %1700 = vmatprep.subr.mxu0 0.0
        %1701 = vmatpush2.xpose.msra.mxu0 0.0
        %1702 = vmatprep.subr.mxu0 0.0
        %1703 = vmatpush2.xpose.msra.mxu0 0.0
        %1704 = vmatprep.subr.mxu0 0.0
        %1705 = vmatpush2.xpose.msra.mxu0 0.0
        %1706 = vmatprep.subr.mxu0 0.0
        %1707 = vmatpush2.xpose.msra.mxu0 0.0
        %1708 = vmatprep.subr.mxu0 0.0
        %1709 = vmatpush2.xpose.msra.mxu0 0.0
        %1710 = vmatprep.mubr.f32.mxu0 %v1488
        %1711 = vmatmul.mubr.f32.gmra.mxu0 %v1487
        %v1712 = vpop.f32.mrf.mxu0
        %v1713 = vadd.f32 %v1643, %v1712
        %v1714 = vpop.f32.mrf.mxu0
        %1715 = vdwg.mxu0
        %1716 = vmatprep.subr.mxu0 0.0
        %1717 = vmatpush1.xpose.msra.mxu0 0.0
        %1718 = vmatprep.subr.mxu0 0.0
        %1719 = vmatpush1.xpose.msra.mxu0 0.0
        %1720 = vmatprep.subr.mxu0 0.0
        %1721 = vmatpush1.xpose.msra.mxu0 0.0
        %1722 = vmatprep.subr.mxu0 0.0
        %1723 = vmatpush1.xpose.msra.mxu0 0.0
        %1724 = vmatprep.subr.mxu0 0.0
        %1725 = vmatpush1.xpose.msra.mxu0 0.0
        %1726 = vmatprep.subr.mxu0 0.0
        %1727 = vmatpush1.xpose.msra.mxu0 0.0
        %1728 = vmatprep.subr.mxu0 0.0
        %1729 = vmatpush1.xpose.msra.mxu0 0.0
        %1730 = vmatprep.subr.mxu0 0.0
        %1731 = vmatpush1.xpose.msra.mxu0 0.0
        %1732 = vmatprep.subr.mxu0 0.0
        %1733 = vmatpush1.xpose.msra.mxu0 0.0
        %1734 = vmatprep.subr.mxu0 0.0
        %1735 = vmatpush1.xpose.msra.mxu0 0.0
        %1736 = vmatprep.subr.mxu0 0.0
        %1737 = vmatpush1.xpose.msra.mxu0 0.0
        %1738 = vmatprep.subr.mxu0 0.0
        %1739 = vmatpush1.xpose.msra.mxu0 0.0
        %1740 = vmatprep.subr.mxu0 0.0
        %1741 = vmatpush1.xpose.msra.mxu0 0.0
        %1742 = vmatprep.subr.mxu0 0.0
        %1743 = vmatpush1.xpose.msra.mxu0 0.0
        %1744 = vmatprep.subr.mxu0 %v1426
        %1745 = vmatpush1.xpose.msra.mxu0 %v1425
        %1746 = vmatprep.subr.mxu0 %v1416
        %1747 = vmatpush1.xpose.msra.mxu0 %v1415
        %1748 = vmatprep.subr.mxu0 0.0
        %1749 = vmatpush2.xpose.msra.mxu0 0.0
        %1750 = vmatprep.subr.mxu0 0.0
        %1751 = vmatpush2.xpose.msra.mxu0 0.0
        %1752 = vmatprep.subr.mxu0 0.0
        %1753 = vmatpush2.xpose.msra.mxu0 0.0
        %1754 = vmatprep.subr.mxu0 0.0
        %1755 = vmatpush2.xpose.msra.mxu0 0.0
        %1756 = vmatprep.subr.mxu0 0.0
        %1757 = vmatpush2.xpose.msra.mxu0 0.0
        %1758 = vmatprep.subr.mxu0 0.0
        %1759 = vmatpush2.xpose.msra.mxu0 0.0
        %1760 = vmatprep.subr.mxu0 0.0
        %1761 = vmatpush2.xpose.msra.mxu0 0.0
        %1762 = vmatprep.subr.mxu0 0.0
        %1763 = vmatpush2.xpose.msra.mxu0 0.0
        %1764 = vmatprep.subr.mxu0 0.0
        %1765 = vmatpush2.xpose.msra.mxu0 0.0
        %1766 = vmatprep.subr.mxu0 0.0
        %1767 = vmatpush2.xpose.msra.mxu0 0.0
        %1768 = vmatprep.subr.mxu0 0.0
        %1769 = vmatpush2.xpose.msra.mxu0 0.0
        %1770 = vmatprep.subr.mxu0 0.0
        %1771 = vmatpush2.xpose.msra.mxu0 0.0
        %1772 = vmatprep.subr.mxu0 0.0
        %1773 = vmatpush2.xpose.msra.mxu0 0.0
        %1774 = vmatprep.subr.mxu0 0.0
        %1775 = vmatpush2.xpose.msra.mxu0 0.0
        %1776 = vmatprep.subr.mxu0 0.0
        %1777 = vmatpush2.xpose.msra.mxu0 0.0
        %1778 = vmatprep.subr.mxu0 0.0
        %1779 = vmatpush2.xpose.msra.mxu0 0.0
        %1780 = vmatprep.mubr.f32.mxu0 %v1490
        %1781 = vmatmul.mubr.f32.gmra.mxu0 %v1489
        %v1782 = vpop.f32.mrf.mxu0
        %v1783 = vadd.f32 %v1713, %v1782
        %v1784 = vpop.f32.mrf.mxu0
        %1785 = vdwg.mxu0
        %1786 = vmatprep.subr.mxu0 0.0
        %1787 = vmatpush1.xpose.msra.mxu0 0.0
        %1788 = vmatprep.subr.mxu0 0.0
        %1789 = vmatpush1.xpose.msra.mxu0 0.0
        %1790 = vmatprep.subr.mxu0 0.0
        %1791 = vmatpush1.xpose.msra.mxu0 0.0
        %1792 = vmatprep.subr.mxu0 0.0
        %1793 = vmatpush1.xpose.msra.mxu0 0.0
        %1794 = vmatprep.subr.mxu0 0.0
        %1795 = vmatpush1.xpose.msra.mxu0 0.0
        %1796 = vmatprep.subr.mxu0 0.0
        %1797 = vmatpush1.xpose.msra.mxu0 0.0
        %1798 = vmatprep.subr.mxu0 0.0
        %1799 = vmatpush1.xpose.msra.mxu0 0.0
        %1800 = vmatprep.subr.mxu0 0.0
        %1801 = vmatpush1.xpose.msra.mxu0 0.0
        %1802 = vmatprep.subr.mxu0 0.0
        %1803 = vmatpush1.xpose.msra.mxu0 0.0
        %1804 = vmatprep.subr.mxu0 0.0
        %1805 = vmatpush1.xpose.msra.mxu0 0.0
        %1806 = vmatprep.subr.mxu0 0.0
        %1807 = vmatpush1.xpose.msra.mxu0 0.0
        %1808 = vmatprep.subr.mxu0 0.0
        %1809 = vmatpush1.xpose.msra.mxu0 0.0
        %1810 = vmatprep.subr.mxu0 0.0
        %1811 = vmatpush1.xpose.msra.mxu0 0.0
        %1812 = vmatprep.subr.mxu0 0.0
        %1813 = vmatpush1.xpose.msra.mxu0 0.0
        %1814 = vmatprep.subr.mxu0 %v1504
        %1815 = vmatpush1.xpose.msra.mxu0 %v1427
        %1816 = vmatprep.subr.mxu0 %v1501
        %1817 = vmatpush1.xpose.msra.mxu0 %v1417
        %1818 = vmatprep.subr.mxu0 0.0
        %1819 = vmatpush2.xpose.msra.mxu0 0.0
        %1820 = vmatprep.subr.mxu0 0.0
        %1821 = vmatpush2.xpose.msra.mxu0 0.0
        %1822 = vmatprep.subr.mxu0 0.0
        %1823 = vmatpush2.xpose.msra.mxu0 0.0
        %1824 = vmatprep.subr.mxu0 0.0
        %1825 = vmatpush2.xpose.msra.mxu0 0.0
        %1826 = vmatprep.subr.mxu0 0.0
        %1827 = vmatpush2.xpose.msra.mxu0 0.0
        %1828 = vmatprep.subr.mxu0 0.0
        %1829 = vmatpush2.xpose.msra.mxu0 0.0
        %1830 = vmatprep.subr.mxu0 0.0
        %1831 = vmatpush2.xpose.msra.mxu0 0.0
        %1832 = vmatprep.subr.mxu0 0.0
        %1833 = vmatpush2.xpose.msra.mxu0 0.0
        %1834 = vmatprep.subr.mxu0 0.0
        %1835 = vmatpush2.xpose.msra.mxu0 0.0
        %1836 = vmatprep.subr.mxu0 0.0
        %1837 = vmatpush2.xpose.msra.mxu0 0.0
        %1838 = vmatprep.subr.mxu0 0.0
        %1839 = vmatpush2.xpose.msra.mxu0 0.0
        %1840 = vmatprep.subr.mxu0 0.0
        %1841 = vmatpush2.xpose.msra.mxu0 0.0
        %1842 = vmatprep.subr.mxu0 0.0
        %1843 = vmatpush2.xpose.msra.mxu0 0.0
        %1844 = vmatprep.subr.mxu0 0.0
        %1845 = vmatpush2.xpose.msra.mxu0 0.0
        %1846 = vmatprep.subr.mxu0 0.0
        %1847 = vmatpush2.xpose.msra.mxu0 0.0
        %1848 = vmatprep.subr.mxu0 0.0
        %1849 = vmatpush2.xpose.msra.mxu0 0.0
        %1850 = vmatprep.mubr.f32.mxu0 %v1498
        %1851 = vmatmul.mubr.f32.gmra.mxu0 %v1491
        %v1852 = vpop.f32.mrf.mxu0
        %v1853 = vadd.f32 %v1783, %v1852
        %v1854 = vpop.f32.mrf.mxu0
        %1855 = vdwg.mxu0
        %v1856 = vld [vmem:[%s457] sm:$0x1]
        %v1858 = vlaneseq
        %v1859 = vshrl.u32 %v1858, 7
        %v1860 = vsub.s32 0, %v1859
        %v1861 = vrot.slane %v1856, %v1860
        %v1863 = vadd.f32 %v1853, %v1861
        %vm1864 = vcmask 130048
        %1865 = vst.msk [vmem:[%s454] sm:$0xff] %vm1864, %v1863
        %s1866 = sand.u32 %s245, 1
        %s1867 = scalar_lea.sflag [#allocation5], %s1866
        %s1868 = sand.u32 %s245, 1
        %s1869 = smul.addr %s1868, 8
        %s1870 = scalar_lea.vmem [#allocation14], %s1869
        // Predicated region
        $region81: #{tpu_custom_call.1} parent=55 // pred_check
          %p1871 = pneg %p255
        $region82: #{tpu_custom_call.1} parent=55 // pred_check_branch
          %1873 = sbr.rel (%p1871) target = $region84
        $region83: #{tpu_custom_call.1} parent=55 // pred_region
          %s1875 = ssub.s32 128, 128
          %1876 = vsyncadd %s1867, %s1875
          %s1877 = smul.addr %s33, 128
          %s1878 = scalar_lea.hbm %s9, %s1877
          %s1880 = sshll.u32 %s1870, 4
          %s1881 = int_to_ptr.vmem [resolvable:$true] %s1880
          %1883 = dma.vmem_to_hbm [thread:$0]  %s1881, 128, %s1878, %s1867
        $region84: #{tpu_custom_call.1} parent=55 // pred_fallthru
          _
      $region56: #{tpu_custom_call.1} parent=5 // pred_fallthru
        _
      %p1884 = scmp.le.s32.totalorder 2, %s28
      // Predicated region
      $region85: #{tpu_custom_call.1} parent=5 // pred_check
        %p1885 = pneg %p1884
      $region86: #{tpu_custom_call.1} parent=5 // pred_check_branch
        %1887 = sbr.rel (%p1885) target = $region88
      $region87: #{tpu_custom_call.1} parent=5 // pred_region
        %s1888 = ssub.s32 %s28, 2
        // Predicated region
        $region89: #{tpu_custom_call.1} parent=87 // pred_check
          %p1889 = pneg %p261
        $region90: #{tpu_custom_call.1} parent=87 // pred_check_branch
          %1891 = sbr.rel (%p1889) target = $region92
        $region91: #{tpu_custom_call.1} parent=87 // pred_region
          %s1892 = sand.u32 %s246, 1
          %s1893 = scalar_lea.sflag [#allocation5], %s1892
          %s1894 = sand.u32 %s246, 1
          %s1895 = smul.addr %s1894, 8
          %s1896 = scalar_lea.vmem [#allocation14], %s1895
          %1897 = dma.done %s1893, 128
        $region92: #{tpu_custom_call.1} parent=87 // pred_fallthru
          _
      $region88: #{tpu_custom_call.1} parent=5 // pred_fallthru
        _
    $region6: #{tpu_custom_call.1} parent=1 // loop_footer
      %s32 = sadd.s32 1, %s28
    $region7: #{tpu_custom_call.1} parent=1 // loop_footer_branch
      %27 = sbr.rel target = $region3
    $region8: #{tpu_custom_call.1} parent=1 // loop_exit
      _
    %1898 = vsyncpa [#allocation4], 1
    %s1899 = scalar_lea.sflag [#allocation4], 1
    %1900 = vsyncpa %s1899, 1
    %1901 = vsyncpa [#allocation7], 1
    %s1902 = scalar_lea.sflag [#allocation7], 1
    %1903 = vsyncpa %s1902, 1
    %1904 = vsyncpa [#allocation10], 1
    %1905 = vsyncpa [#allocation13], 1
    %1906 = vsyncpa [#allocation5], 1
    %s1907 = scalar_lea.sflag [#allocation5], 1
    %1908 = vsyncpa %s1907, 1

</llo_original>
